<compile_context>
chip_gen: v7x
topology: tpu7x:2x2x1
jax: 0.10.0
libtpu: 0.0.40
codegen_flags: <defaults>
</compile_context>

<pallas_src>
import numpy as np
import jax
import jax.numpy as jnp
from jax.experimental import pallas as pl
from jax.experimental.pallas import tpu as pltpu


def down_wt_kernel(p_ref, scale_ref, shift_ref, w_ref, bias_ref, o_ref):
    # p_ref: (4, tm, C) -- the four 2x2-block phases a,b,c,d, each a (tm, C) tile.
    a = p_ref[0]
    b = p_ref[1]
    c = p_ref[2]
    d = p_ref[3]

    # Haar DWT, J=1, mode='zero', even H/W: per-2x2-block butterflies (filters 1/sqrt(2)).
    ll = (a + b + c + d) * 0.5   # yL
    s1 = (a + b - c - d) * 0.5   # y_HL
    s2 = (a - b + c - d) * 0.5   # y_LH
    s3 = (a - b - c + d) * 0.5   # y_HH

    # BatchNorm2d (eval-mode folded running-stat affine) + ReLU, per sub-band.
    # TODO(synk): training-mode BatchNorm (batch statistics) not implemented; eval-mode stats used.
    f0 = jnp.maximum(ll * scale_ref[0] + shift_ref[0], 0.0)
    f1 = jnp.maximum(s1 * scale_ref[1] + shift_ref[1], 0.0)
    f2 = jnp.maximum(s2 * scale_ref[2] + shift_ref[2], 0.0)
    f3 = jnp.maximum(s3 * scale_ref[3] + shift_ref[3], 0.0)

    # 1x1 Conv2d over channels == (tm,4C)@(4C,O) matmul, split into 4 partial matmuls
    # (identical math, avoids the lane-axis concat).
    out = jnp.dot(f0, w_ref[0], preferred_element_type=jnp.float32)
    out = out + jnp.dot(f1, w_ref[1], preferred_element_type=jnp.float32)
    out = out + jnp.dot(f2, w_ref[2], preferred_element_type=jnp.float32)
    out = out + jnp.dot(f3, w_ref[3], preferred_element_type=jnp.float32)
    out = out + bias_ref[...]
    o_ref[...] = out.astype(o_ref.dtype)


def _round_up(x, m):
    return ((x + m - 1) // m) * m


def _pick_tm(M):
    # Big row tiles amortize the ~0.35us per-grid-step overhead on this mem-bound kernel.
    target = 1024
    if M >= 2 * target:
        return target
    # Small problem: keep >= 2 grid steps (so the 'parallel' axis can shard across
    # both TensorCores on v7x) and keep sublane (x8) alignment.
    return max(8, _round_up((M + 1) // 2, 8))


def down_wt_forward(x, gamma, beta, run_mean, run_var, conv_w, conv_b, eps=1e-5):
    N, C, H, W = x.shape
    out_ch = conv_w.shape[0]
    Ho, Wo = H // 2, W // 2
    M = N * Ho * Wo

    # Single packing pass: NCHW -> (4, M, C); phase p=(hp,wp) is x[:, :, hp::2, wp::2]
    # in NHWC order with (N, Ho, Wo) flattened into rows.
    packed = jnp.transpose(
        x.reshape(N, C, Ho, 2, Wo, 2), (3, 5, 0, 2, 4, 1)).reshape(4, M, C)

    tm = _pick_tm(M)
    M_pad = _round_up(M, tm)
    if M_pad != M:
        packed = jnp.pad(packed, ((0, 0), (0, M_pad - M), (0, 0)))

    # Fold BN running stats + affine into per-channel scale/shift over the 4C concat axis,
    # split per sub-band: index k covers channels [k*C, (k+1)*C).
    inv_std = 1.0 / jnp.sqrt(run_var + eps)
    scale4 = (gamma * inv_std).reshape(4, 1, C)
    shift4 = (beta - run_mean * gamma * inv_std).reshape(4, 1, C)

    # 1x1 conv weight (out_ch, 4C, 1, 1) -> (4, C, out_ch): w4[k] maps sub-band k's channels.
    w4 = jnp.transpose(conv_w.reshape(out_ch, 4, C), (1, 2, 0))
    bias = conv_b.reshape(1, out_ch)

    grid = (M_pad // tm,)

    # Advisory cost estimate: this kernel is HBM-bandwidth bound, flops are tiny.
    flops = 2 * M_pad * (4 * C) * out_ch + 16 * M_pad * C
    bytes_accessed = 4 * (4 * M_pad * C + M_pad * out_ch
                          + 4 * C * out_ch + 8 * C + out_ch)

    out_flat = pl.pallas_call(
        down_wt_kernel,
        out_shape=jax.ShapeDtypeStruct((M_pad, out_ch), x.dtype),
        grid_spec=pltpu.PrefetchScalarGridSpec(
            num_scalar_prefetch=0,
            grid=grid,
            in_specs=[
                pl.BlockSpec((4, tm, C), lambda i: (0, i, 0)),        # packed phases
                pl.BlockSpec((4, 1, C), lambda i: (0, 0, 0)),          # BN scale
                pl.BlockSpec((4, 1, C), lambda i: (0, 0, 0)),          # BN shift
                pl.BlockSpec((4, C, out_ch), lambda i: (0, 0, 0)),     # conv weight
                pl.BlockSpec((1, out_ch), lambda i: (0, 0)),           # conv bias
            ],
            out_specs=pl.BlockSpec((tm, out_ch), lambda i: (i, 0)),
        ),
        compiler_params=pltpu.CompilerParams(
            dimension_semantics=("parallel",),
            vmem_limit_bytes=32 * 1024 * 1024),
        cost_estimate=pl.CostEstimate(
            flops=flops, transcendentals=0, bytes_accessed=bytes_accessed),
    )(packed, scale4, shift4, w4, bias)

    out = out_flat[:M].reshape(N, Ho, Wo, out_ch)
    return jnp.transpose(out, (0, 3, 1, 2))  # back to NCHW


def ref_forward(x, gamma, beta, rm, rv, cw, cb, eps=1e-5):
    # Pure-JAX reference of the same semantics (NCHW).
    a = x[:, :, 0::2, 0::2]
    b = x[:, :, 0::2, 1::2]
    c = x[:, :, 1::2, 0::2]
    d = x[:, :, 1::2, 1::2]
    ll = (a + b + c + d) * 0.5
    s1 = (a + b - c - d) * 0.5
    s2 = (a - b + c - d) * 0.5
    s3 = (a - b - c + d) * 0.5
    feat = jnp.concatenate([ll, s1, s2, s3], axis=1)  # (N, 4C, Ho, Wo)
    feat = (feat - rm[None, :, None, None]) / jnp.sqrt(rv + eps)[None, :, None, None]
    feat = feat * gamma[None, :, None, None] + beta[None, :, None, None]
    feat = jnp.maximum(feat, 0.0)
    w2d = cw.reshape(cw.shape[0], -1)  # (out_ch, 4C)
    out = jnp.einsum('nchw,oc->nohw', feat, w2d) + cb[None, :, None, None]
    return out


if __name__ == "__main__":
    key = jax.random.PRNGKey(0)
    N, in_ch, H, W = 2, 4, 16, 16
    out_ch = 8

    k1, k2, k3 = jax.random.split(key, 3)
    x = jax.random.normal(k1, (N, in_ch, H, W), jnp.float32)

    # BatchNorm2d(in_ch * 4) parameters, PyTorch default init.
    C4 = 4 * in_ch
    gamma = jnp.ones((C4,), jnp.float32)
    beta = jnp.zeros((C4,), jnp.float32)
    run_mean = jnp.zeros((C4,), jnp.float32)
    run_var = jnp.ones((C4,), jnp.float32)

    # Conv2d(in_ch * 4, out_ch, kernel_size=1) weights, deterministic uniform init.
    fan_in = C4
    bound = float(np.sqrt(1.0 / fan_in))
    conv_w = jax.random.uniform(k2, (out_ch, C4, 1, 1), jnp.float32, -bound, bound)
    conv_b = jax.random.uniform(k3, (out_ch,), jnp.float32, -bound, bound)

    out = down_wt_forward(x, gamma, beta, run_mean, run_var, conv_w, conv_b)
    out = jax.block_until_ready(out)

    ref = ref_forward(x, gamma, beta, run_mean, run_var, conv_w, conv_b)
    assert out.shape == (N, out_ch, H // 2, W // 2), out.shape
    np.testing.assert_allclose(np.asarray(out), np.asarray(ref), atol=1e-5, rtol=1e-5)

    print("KERNEL_OK")
</pallas_src>

<mosaic_0001>
module attributes {stable_mosaic.version = 11 : i64} {
  func.func @down_wt_kernel(%arg0: i32, %arg1: memref<4x64x4xf32, #tpu.memory_space<vmem>>, %arg2: memref<4x1x4xf32, #tpu.memory_space<vmem>>, %arg3: memref<4x1x4xf32, #tpu.memory_space<vmem>>, %arg4: memref<4x4x8xf32, #tpu.memory_space<vmem>>, %arg5: memref<1x8xf32, #tpu.memory_space<vmem>>, %arg6: memref<64x8xf32, #tpu.memory_space<vmem>>) attributes {dimension_semantics = [#tpu.dimension_semantics<parallel>], iteration_bounds = array<i64: 2>, scalar_prefetch = 0 : i64, scratch_operands = 0 : i64, tpu.core_type = #tpu.core_type<tc>, window_params = [{transform_indices = @transform_0, window_bounds = array<i64: 4, 64, 4>}, {pipeline_mode = #tpu.pipeline_mode<synchronous>, transform_indices = @transform_1, window_bounds = array<i64: 4, 1, 4>}, {pipeline_mode = #tpu.pipeline_mode<synchronous>, transform_indices = @transform_2, window_bounds = array<i64: 4, 1, 4>}, {pipeline_mode = #tpu.pipeline_mode<synchronous>, transform_indices = @transform_3, window_bounds = array<i64: 4, 4, 8>}, {pipeline_mode = #tpu.pipeline_mode<synchronous>, transform_indices = @transform_4, window_bounds = array<i64: 1, 8>}, {transform_indices = @transform_5, window_bounds = array<i64: 64, 8>}]} {
    %c0 = arith.constant 0 : index
    %c0_0 = arith.constant 0 : index
    %c0_1 = arith.constant 0 : index
    %0 = vector.load %arg1[%c0, %c0_0, %c0_1] : memref<4x64x4xf32, #tpu.memory_space<vmem>>, vector<1x64x4xf32>
    %1 = vector.shape_cast %0 : vector<1x64x4xf32> to vector<64x4xf32>
    %c1 = arith.constant 1 : index
    %c0_2 = arith.constant 0 : index
    %c0_3 = arith.constant 0 : index
    %2 = vector.load %arg1[%c1, %c0_2, %c0_3] : memref<4x64x4xf32, #tpu.memory_space<vmem>>, vector<1x64x4xf32>
    %3 = vector.shape_cast %2 : vector<1x64x4xf32> to vector<64x4xf32>
    %c2 = arith.constant 2 : index
    %c0_4 = arith.constant 0 : index
    %c0_5 = arith.constant 0 : index
    %4 = vector.load %arg1[%c2, %c0_4, %c0_5] : memref<4x64x4xf32, #tpu.memory_space<vmem>>, vector<1x64x4xf32>
    %5 = vector.shape_cast %4 : vector<1x64x4xf32> to vector<64x4xf32>
    %c3 = arith.constant 3 : index
    %c0_6 = arith.constant 0 : index
    %c0_7 = arith.constant 0 : index
    %6 = vector.load %arg1[%c3, %c0_6, %c0_7] : memref<4x64x4xf32, #tpu.memory_space<vmem>>, vector<1x64x4xf32>
    %7 = vector.shape_cast %6 : vector<1x64x4xf32> to vector<64x4xf32>
    %8 = arith.addf %1, %3 : vector<64x4xf32>
    %9 = arith.addf %8, %5 : vector<64x4xf32>
    %10 = arith.addf %9, %7 : vector<64x4xf32>
    %cst = arith.constant 5.000000e-01 : f32
    %11 = vector.broadcast %cst : f32 to vector<64x4xf32>
    %12 = arith.mulf %10, %11 : vector<64x4xf32>
    %13 = arith.addf %1, %3 : vector<64x4xf32>
    %14 = arith.subf %13, %5 : vector<64x4xf32>
    %15 = arith.subf %14, %7 : vector<64x4xf32>
    %cst_8 = arith.constant 5.000000e-01 : f32
    %16 = vector.broadcast %cst_8 : f32 to vector<64x4xf32>
    %17 = arith.mulf %15, %16 : vector<64x4xf32>
    %18 = arith.subf %1, %3 : vector<64x4xf32>
    %19 = arith.addf %18, %5 : vector<64x4xf32>
    %20 = arith.subf %19, %7 : vector<64x4xf32>
    %cst_9 = arith.constant 5.000000e-01 : f32
    %21 = vector.broadcast %cst_9 : f32 to vector<64x4xf32>
    %22 = arith.mulf %20, %21 : vector<64x4xf32>
    %23 = arith.subf %1, %3 : vector<64x4xf32>
    %24 = arith.subf %23, %5 : vector<64x4xf32>
    %25 = arith.addf %24, %7 : vector<64x4xf32>
    %cst_10 = arith.constant 5.000000e-01 : f32
    %26 = vector.broadcast %cst_10 : f32 to vector<64x4xf32>
    %27 = arith.mulf %25, %26 : vector<64x4xf32>
    %c0_11 = arith.constant 0 : index
    %c0_12 = arith.constant 0 : index
    %c0_13 = arith.constant 0 : index
    %28 = vector.load %arg2[%c0_11, %c0_12, %c0_13] : memref<4x1x4xf32, #tpu.memory_space<vmem>>, vector<1x1x4xf32>
    %29 = vector.shape_cast %28 : vector<1x1x4xf32> to vector<1x4xf32>
    %30 = vector.broadcast %29 : vector<1x4xf32> to vector<64x4xf32>
    %31 = arith.mulf %12, %30 : vector<64x4xf32>
    %c0_14 = arith.constant 0 : index
    %c0_15 = arith.constant 0 : index
    %c0_16 = arith.constant 0 : index
    %32 = vector.load %arg3[%c0_14, %c0_15, %c0_16] : memref<4x1x4xf32, #tpu.memory_space<vmem>>, vector<1x1x4xf32>
    %33 = vector.shape_cast %32 : vector<1x1x4xf32> to vector<1x4xf32>
    %34 = vector.broadcast %33 : vector<1x4xf32> to vector<64x4xf32>
    %35 = arith.addf %31, %34 : vector<64x4xf32>
    %cst_17 = arith.constant 0.000000e+00 : f32
    %36 = vector.broadcast %cst_17 : f32 to vector<64x4xf32>
    %37 = arith.maximumf %35, %36 : vector<64x4xf32>
    %c1_18 = arith.constant 1 : index
    %c0_19 = arith.constant 0 : index
    %c0_20 = arith.constant 0 : index
    %38 = vector.load %arg2[%c1_18, %c0_19, %c0_20] : memref<4x1x4xf32, #tpu.memory_space<vmem>>, vector<1x1x4xf32>
    %39 = vector.shape_cast %38 : vector<1x1x4xf32> to vector<1x4xf32>
    %40 = vector.broadcast %39 : vector<1x4xf32> to vector<64x4xf32>
    %41 = arith.mulf %17, %40 : vector<64x4xf32>
    %c1_21 = arith.constant 1 : index
    %c0_22 = arith.constant 0 : index
    %c0_23 = arith.constant 0 : index
    %42 = vector.load %arg3[%c1_21, %c0_22, %c0_23] : memref<4x1x4xf32, #tpu.memory_space<vmem>>, vector<1x1x4xf32>
    %43 = vector.shape_cast %42 : vector<1x1x4xf32> to vector<1x4xf32>
    %44 = vector.broadcast %43 : vector<1x4xf32> to vector<64x4xf32>
    %45 = arith.addf %41, %44 : vector<64x4xf32>
    %cst_24 = arith.constant 0.000000e+00 : f32
    %46 = vector.broadcast %cst_24 : f32 to vector<64x4xf32>
    %47 = arith.maximumf %45, %46 : vector<64x4xf32>
    %c2_25 = arith.constant 2 : index
    %c0_26 = arith.constant 0 : index
    %c0_27 = arith.constant 0 : index
    %48 = vector.load %arg2[%c2_25, %c0_26, %c0_27] : memref<4x1x4xf32, #tpu.memory_space<vmem>>, vector<1x1x4xf32>
    %49 = vector.shape_cast %48 : vector<1x1x4xf32> to vector<1x4xf32>
    %50 = vector.broadcast %49 : vector<1x4xf32> to vector<64x4xf32>
    %51 = arith.mulf %22, %50 : vector<64x4xf32>
    %c2_28 = arith.constant 2 : index
    %c0_29 = arith.constant 0 : index
    %c0_30 = arith.constant 0 : index
    %52 = vector.load %arg3[%c2_28, %c0_29, %c0_30] : memref<4x1x4xf32, #tpu.memory_space<vmem>>, vector<1x1x4xf32>
    %53 = vector.shape_cast %52 : vector<1x1x4xf32> to vector<1x4xf32>
    %54 = vector.broadcast %53 : vector<1x4xf32> to vector<64x4xf32>
    %55 = arith.addf %51, %54 : vector<64x4xf32>
    %cst_31 = arith.constant 0.000000e+00 : f32
    %56 = vector.broadcast %cst_31 : f32 to vector<64x4xf32>
    %57 = arith.maximumf %55, %56 : vector<64x4xf32>
    %c3_32 = arith.constant 3 : index
    %c0_33 = arith.constant 0 : index
    %c0_34 = arith.constant 0 : index
    %58 = vector.load %arg2[%c3_32, %c0_33, %c0_34] : memref<4x1x4xf32, #tpu.memory_space<vmem>>, vector<1x1x4xf32>
    %59 = vector.shape_cast %58 : vector<1x1x4xf32> to vector<1x4xf32>
    %60 = vector.broadcast %59 : vector<1x4xf32> to vector<64x4xf32>
    %61 = arith.mulf %27, %60 : vector<64x4xf32>
    %c3_35 = arith.constant 3 : index
    %c0_36 = arith.constant 0 : index
    %c0_37 = arith.constant 0 : index
    %62 = vector.load %arg3[%c3_35, %c0_36, %c0_37] : memref<4x1x4xf32, #tpu.memory_space<vmem>>, vector<1x1x4xf32>
    %63 = vector.shape_cast %62 : vector<1x1x4xf32> to vector<1x4xf32>
    %64 = vector.broadcast %63 : vector<1x4xf32> to vector<64x4xf32>
    %65 = arith.addf %61, %64 : vector<64x4xf32>
    %cst_38 = arith.constant 0.000000e+00 : f32
    %66 = vector.broadcast %cst_38 : f32 to vector<64x4xf32>
    %67 = arith.maximumf %65, %66 : vector<64x4xf32>
    %c0_39 = arith.constant 0 : index
    %c0_40 = arith.constant 0 : index
    %c0_41 = arith.constant 0 : index
    %68 = vector.load %arg4[%c0_39, %c0_40, %c0_41] : memref<4x4x8xf32, #tpu.memory_space<vmem>>, vector<1x4x8xf32>
    %69 = vector.shape_cast %68 : vector<1x4x8xf32> to vector<4x8xf32>
    %cst_42 = arith.constant dense<0.000000e+00> : vector<64x8xf32>
    %70 = tpu.matmul %37, %69, %cst_42 {dimension_numbers = #tpu.dot_dimension_numbers<[1], [0], [0], [1], [0, 0, 1, 1], [], []>} : vector<64x4xf32>, vector<4x8xf32>, vector<64x8xf32> -> vector<64x8xf32>
    %c1_43 = arith.constant 1 : index
    %c0_44 = arith.constant 0 : index
    %c0_45 = arith.constant 0 : index
    %71 = vector.load %arg4[%c1_43, %c0_44, %c0_45] : memref<4x4x8xf32, #tpu.memory_space<vmem>>, vector<1x4x8xf32>
    %72 = vector.shape_cast %71 : vector<1x4x8xf32> to vector<4x8xf32>
    %cst_46 = arith.constant dense<0.000000e+00> : vector<64x8xf32>
    %73 = tpu.matmul %47, %72, %cst_46 {dimension_numbers = #tpu.dot_dimension_numbers<[1], [0], [0], [1], [0, 0, 1, 1], [], []>} : vector<64x4xf32>, vector<4x8xf32>, vector<64x8xf32> -> vector<64x8xf32>
    %74 = arith.addf %70, %73 : vector<64x8xf32>
    %c2_47 = arith.constant 2 : index
    %c0_48 = arith.constant 0 : index
    %c0_49 = arith.constant 0 : index
    %75 = vector.load %arg4[%c2_47, %c0_48, %c0_49] : memref<4x4x8xf32, #tpu.memory_space<vmem>>, vector<1x4x8xf32>
    %76 = vector.shape_cast %75 : vector<1x4x8xf32> to vector<4x8xf32>
    %cst_50 = arith.constant dense<0.000000e+00> : vector<64x8xf32>
    %77 = tpu.matmul %57, %76, %cst_50 {dimension_numbers = #tpu.dot_dimension_numbers<[1], [0], [0], [1], [0, 0, 1, 1], [], []>} : vector<64x4xf32>, vector<4x8xf32>, vector<64x8xf32> -> vector<64x8xf32>
    %78 = arith.addf %74, %77 : vector<64x8xf32>
    %c3_51 = arith.constant 3 : index
    %c0_52 = arith.constant 0 : index
    %c0_53 = arith.constant 0 : index
    %79 = vector.load %arg4[%c3_51, %c0_52, %c0_53] : memref<4x4x8xf32, #tpu.memory_space<vmem>>, vector<1x4x8xf32>
    %80 = vector.shape_cast %79 : vector<1x4x8xf32> to vector<4x8xf32>
    %cst_54 = arith.constant dense<0.000000e+00> : vector<64x8xf32>
    %81 = tpu.matmul %67, %80, %cst_54 {dimension_numbers = #tpu.dot_dimension_numbers<[1], [0], [0], [1], [0, 0, 1, 1], [], []>} : vector<64x4xf32>, vector<4x8xf32>, vector<64x8xf32> -> vector<64x8xf32>
    %82 = arith.addf %78, %81 : vector<64x8xf32>
    %c0_55 = arith.constant 0 : index
    %c0_56 = arith.constant 0 : index
    %83 = vector.load %arg5[%c0_55, %c0_56] : memref<1x8xf32, #tpu.memory_space<vmem>>, vector<1x8xf32>
    %84 = vector.broadcast %83 : vector<1x8xf32> to vector<64x8xf32>
    %85 = arith.addf %82, %84 : vector<64x8xf32>
    %c0_57 = arith.constant 0 : index
    %c0_58 = arith.constant 0 : index
    %86 = vector.load %arg6[%c0_57, %c0_58] : memref<64x8xf32, #tpu.memory_space<vmem>>, vector<64x8xf32>
    tpu.vector_store %arg6[%c0_57, %c0_58], %85 {strides = array<i32>} : memref<64x8xf32, #tpu.memory_space<vmem>>, vector<64x8xf32>,
    return
  }
  func.func @transform_0(%arg0: i32) -> (i32, i32, i32) {
    %c0_i32 = arith.constant 0 : i32
    %c0_i32_0 = arith.constant 0 : i32
    %c0_i32_1 = arith.constant 0 : i32
    return %c0_i32, %arg0, %c0_i32_0 : i32, i32, i32
  }
  func.func @transform_1(%arg0: i32) -> (i32, i32, i32) {
    %c0_i32 = arith.constant 0 : i32
    %c0_i32_0 = arith.constant 0 : i32
    %c0_i32_1 = arith.constant 0 : i32
    %c0_i32_2 = arith.constant 0 : i32
    return %c0_i32, %c0_i32_0, %c0_i32_1 : i32, i32, i32
  }
  func.func @transform_2(%arg0: i32) -> (i32, i32, i32) {
    %c0_i32 = arith.constant 0 : i32
    %c0_i32_0 = arith.constant 0 : i32
    %c0_i32_1 = arith.constant 0 : i32
    %c0_i32_2 = arith.constant 0 : i32
    return %c0_i32, %c0_i32_0, %c0_i32_1 : i32, i32, i32
  }
  func.func @transform_3(%arg0: i32) -> (i32, i32, i32) {
    %c0_i32 = arith.constant 0 : i32
    %c0_i32_0 = arith.constant 0 : i32
    %c0_i32_1 = arith.constant 0 : i32
    %c0_i32_2 = arith.constant 0 : i32
    return %c0_i32, %c0_i32_0, %c0_i32_1 : i32, i32, i32
  }
  func.func @transform_4(%arg0: i32) -> (i32, i32) {
    %c0_i32 = arith.constant 0 : i32
    %c0_i32_0 = arith.constant 0 : i32
    %c0_i32_1 = arith.constant 0 : i32
    return %c0_i32, %c0_i32_0 : i32, i32
  }
  func.func @transform_5(%arg0: i32) -> (i32, i32) {
    %c0_i32 = arith.constant 0 : i32
    %c0_i32_0 = arith.constant 0 : i32
    return %arg0, %c0_i32 : i32, i32
  }
}

</mosaic_0001>

<llo_original>
// kernel: tpu_custom_call.1
$region0: #{tpu_custom_call.1}
  #allocation0 [shape = 'u32[]', space=smem, size = 0x4, offset = 0x4, fixed_abs, tag = 'smem constant byte address 0x4 - core index']
  #allocation1 [shape = 'u32[144,128]{1,0:T(1,128)}', space=vmem, size = 0x12000, scoped, tag = 'internal scratch']
  %s0 = inlined_call_operand.vmem [shape: f32[4,128,4], index: 0, kind: input, shape index: {}]
  %s1 = inlined_call_operand.vmem [shape: f32[4,1,4], index: 1, kind: input, shape index: {}]
  %s2 = inlined_call_operand.vmem [shape: f32[4,1,4], index: 2, kind: input, shape index: {}]
  %s3 = inlined_call_operand.vmem [shape: f32[4,4,8], index: 3, kind: input, shape index: {}]
  %s4 = inlined_call_operand.vmem [shape: f32[1,8], index: 4, kind: input, shape index: {}]
  %s5 = inlined_call_operand.vmem [shape: f32[128,8], index: 5, kind: output, shape index: {}]
  %s6 = sld [smem:[#allocation0]]
  $region91: #{tpu_custom_call.1} parent=0
    _
  %s8 = ssub.s32 1, %s6
  %s9 = scalar_select 0, %s8, %s6
  $region1: #{tpu_custom_call.1} parent=0
    #allocation2 [shape = 'u8[262144]{0}', space=vmem, size = 0x40000, scoped, tag = 'input window, operand 0']
    loop: start=0, step=1, limit=4
    $region2: #{tpu_custom_call.1} parent=1 // loop_pre_header
      _
    $region3: #{tpu_custom_call.1} parent=1 // loop_header
      %s11 = sphi 0, %s15
      %p12 = scmp.ge.s32.totalorder %s11, 4
      %s21 = sphi 0, %s23
      %s24 = sphi 0, %s21
      %s25 = sphi 0, %s24
      %s41 = sphi 0, %s25
      %s45 = sphi 0, %s45
      %s47 = sphi 0, %s45
      %s48 = sphi 0, %s47
      %s62 = sphi 0, %s48
      %s66 = sphi 0, %s66
      %s68 = sphi 0, %s66
      %s69 = sphi 0, %s68
      %s83 = sphi 0, %s69
      %s87 = sphi 0, %s87
      %s89 = sphi 0, %s87
      %s90 = sphi 0, %s89
      %s104 = sphi 0, %s90
      %s108 = sphi 0, %s108
      %s110 = sphi 0, %s108
      %s111 = sphi 0, %s110
      %s125 = sphi 0, %s111
      %s131 = sphi 0, %s133
      %s134 = sphi 0, %s131
      %s135 = sphi 0, %s134
      %s151 = sphi 0, %s135
    $region4: #{tpu_custom_call.1} parent=1 // loop_header_branch
      %14 = sbr.rel (%p12) target = $region8
    $region5: #{tpu_custom_call.1} parent=1 // loop_body
      %s16 = ssub.s32 %s11, 1
      %s17 = ssub.s32 %s11, 2
      %s18 = sadd.s32 %s11, 1
      %s19 = ssub.s32 %s11, %s18
      %p20 = scmp.eq.s32.totalorder %s19, 0
      %s22 = sadd.s32 %s21, 1
      %s23 = scalar_select %p20, %s21, %s22
      %p26 = pneg %p20
      %p27 = scmp.eq.s32.totalorder %s11, 1
      %p28 = por %p26, %p27
      %p29 = scmp.ne.s32.totalorder %s21, %s24
      %p30 = scmp.eq.s32.totalorder %s11, 0
      %p31 = por %p29, %p30
      %p32 = scmp.ne.s32.totalorder %s21, %s24
      %p33 = scmp.eq.s32.totalorder %s16, 1
      %p34 = por %p32, %p33
      %p35 = scmp.ne.s32.totalorder %s24, %s25
      %p36 = scmp.eq.s32.totalorder %s16, 0
      %p37 = por %p35, %p36
      %p38 = scmp.ne.s32.totalorder %s24, %s25
      %p39 = scmp.eq.s32.totalorder %s17, 1
      %p40 = por %p38, %p39
      %p42 = scmp.ne.s32.totalorder %s25, %s41
      %p43 = scmp.eq.s32.totalorder %s17, 0
      %p44 = por %p42, %p43
      %s46 = sadd.s32 %s45, 1
      %p49 = scmp.eq.s32.totalorder %s11, 1
      %p50 = scmp.ne.s32.totalorder %s45, %s47
      %p51 = scmp.eq.s32.totalorder %s11, 0
      %p52 = por %p50, %p51
      %p53 = scmp.ne.s32.totalorder %s45, %s47
      %p54 = scmp.eq.s32.totalorder %s16, 1
      %p55 = por %p53, %p54
      %p56 = scmp.ne.s32.totalorder %s47, %s48
      %p57 = scmp.eq.s32.totalorder %s16, 0
      %p58 = por %p56, %p57
      %p59 = scmp.ne.s32.totalorder %s47, %s48
      %p60 = scmp.eq.s32.totalorder %s17, 1
      %p61 = por %p59, %p60
      %p63 = scmp.ne.s32.totalorder %s48, %s62
      %p64 = scmp.eq.s32.totalorder %s17, 0
      %p65 = por %p63, %p64
      %s67 = sadd.s32 %s66, 1
      %p70 = scmp.eq.s32.totalorder %s11, 1
      %p71 = scmp.ne.s32.totalorder %s66, %s68
      %p72 = scmp.eq.s32.totalorder %s11, 0
      %p73 = por %p71, %p72
      %p74 = scmp.ne.s32.totalorder %s66, %s68
      %p75 = scmp.eq.s32.totalorder %s16, 1
      %p76 = por %p74, %p75
      %p77 = scmp.ne.s32.totalorder %s68, %s69
      %p78 = scmp.eq.s32.totalorder %s16, 0
      %p79 = por %p77, %p78
      %p80 = scmp.ne.s32.totalorder %s68, %s69
      %p81 = scmp.eq.s32.totalorder %s17, 1
      %p82 = por %p80, %p81
      %p84 = scmp.ne.s32.totalorder %s69, %s83
      %p85 = scmp.eq.s32.totalorder %s17, 0
      %p86 = por %p84, %p85
      %s88 = sadd.s32 %s87, 1
      %p91 = scmp.eq.s32.totalorder %s11, 1
      %p92 = scmp.ne.s32.totalorder %s87, %s89
      %p93 = scmp.eq.s32.totalorder %s11, 0
      %p94 = por %p92, %p93
      %p95 = scmp.ne.s32.totalorder %s87, %s89
      %p96 = scmp.eq.s32.totalorder %s16, 1
      %p97 = por %p95, %p96
      %p98 = scmp.ne.s32.totalorder %s89, %s90
      %p99 = scmp.eq.s32.totalorder %s16, 0
      %p100 = por %p98, %p99
      %p101 = scmp.ne.s32.totalorder %s89, %s90
      %p102 = scmp.eq.s32.totalorder %s17, 1
      %p103 = por %p101, %p102
      %p105 = scmp.ne.s32.totalorder %s90, %s104
      %p106 = scmp.eq.s32.totalorder %s17, 0
      %p107 = por %p105, %p106
      %s109 = sadd.s32 %s108, 1
      %p112 = scmp.eq.s32.totalorder %s11, 1
      %p113 = scmp.ne.s32.totalorder %s108, %s110
      %p114 = scmp.eq.s32.totalorder %s11, 0
      %p115 = por %p113, %p114
      %p116 = scmp.ne.s32.totalorder %s108, %s110
      %p117 = scmp.eq.s32.totalorder %s16, 1
      %p118 = por %p116, %p117
      %p119 = scmp.ne.s32.totalorder %s110, %s111
      %p120 = scmp.eq.s32.totalorder %s16, 0
      %p121 = por %p119, %p120
      %p122 = scmp.ne.s32.totalorder %s110, %s111
      %p123 = scmp.eq.s32.totalorder %s17, 1
      %p124 = por %p122, %p123
      %p126 = scmp.ne.s32.totalorder %s111, %s125
      %p127 = scmp.eq.s32.totalorder %s17, 0
      %p128 = por %p126, %p127
      %s129 = ssub.s32 %s11, %s18
      %p130 = scmp.eq.s32.totalorder %s129, 0
      %s132 = sadd.s32 %s131, 1
      %s133 = scalar_select %p130, %s131, %s132
      %p136 = pneg %p130
      %p137 = scmp.eq.s32.totalorder %s11, 1
      %p138 = por %p136, %p137
      %p139 = scmp.ne.s32.totalorder %s131, %s134
      %p140 = scmp.eq.s32.totalorder %s11, 0
      %p141 = por %p139, %p140
      %p142 = scmp.ne.s32.totalorder %s131, %s134
      %p143 = scmp.eq.s32.totalorder %s16, 1
      %p144 = por %p142, %p143
      %p145 = scmp.ne.s32.totalorder %s134, %s135
      %p146 = scmp.eq.s32.totalorder %s16, 0
      %p147 = por %p145, %p146
      %p148 = scmp.ne.s32.totalorder %s134, %s135
      %p149 = scmp.eq.s32.totalorder %s17, 1
      %p150 = por %p148, %p149
      %p152 = scmp.ne.s32.totalorder %s135, %s151
      %p153 = scmp.eq.s32.totalorder %s17, 0
      %p154 = por %p152, %p153
      %p155 = scmp.le.s32.totalorder 1, %s11
      %p156 = scmp.lt.s32.totalorder %s11, 3
      %p157 = pnand %p155, %p156
      %p158 = pneg %p157
      // Predicated region
      $region9: #{tpu_custom_call.1} parent=5 // pred_check
        _
      $region10: #{tpu_custom_call.1} parent=5 // pred_check_branch
        %160 = sbr.rel (%p157) target = $region12
      $region11: #{tpu_custom_call.1} parent=5 // pred_region
        %s161 = ssub.s32 %s11, 1
        // Predicated region
        $region13: #{tpu_custom_call.1} parent=11 // pred_check
          %p162 = pneg %p58
        $region14: #{tpu_custom_call.1} parent=11 // pred_check_branch
          %164 = sbr.rel (%p162) target = $region16
        $region15: #{tpu_custom_call.1} parent=11 // pred_region
          _
        $region16: #{tpu_custom_call.1} parent=11 // pred_fallthru
          _
        // Predicated region
        $region17: #{tpu_custom_call.1} parent=11 // pred_check
          %p165 = pneg %p79
        $region18: #{tpu_custom_call.1} parent=11 // pred_check_branch
          %167 = sbr.rel (%p165) target = $region20
        $region19: #{tpu_custom_call.1} parent=11 // pred_region
          _
        $region20: #{tpu_custom_call.1} parent=11 // pred_fallthru
          _
        // Predicated region
        $region21: #{tpu_custom_call.1} parent=11 // pred_check
          %p168 = pneg %p100
        $region22: #{tpu_custom_call.1} parent=11 // pred_check_branch
          %170 = sbr.rel (%p168) target = $region24
        $region23: #{tpu_custom_call.1} parent=11 // pred_region
          _
        $region24: #{tpu_custom_call.1} parent=11 // pred_fallthru
          _
        // Predicated region
        $region25: #{tpu_custom_call.1} parent=11 // pred_check
          %p171 = pneg %p121
        $region26: #{tpu_custom_call.1} parent=11 // pred_check_branch
          %173 = sbr.rel (%p171) target = $region28
        $region27: #{tpu_custom_call.1} parent=11 // pred_region
          _
        $region28: #{tpu_custom_call.1} parent=11 // pred_fallthru
          _
      $region12: #{tpu_custom_call.1} parent=5 // pred_fallthru
        _
      %p174 = scmp.lt.s32.totalorder %s11, 2
      // Predicated region
      $region29: #{tpu_custom_call.1} parent=5 // pred_check
        %p175 = pneg %p174
      $region30: #{tpu_custom_call.1} parent=5 // pred_check_branch
        %177 = sbr.rel (%p175) target = $region32
      $region31: #{tpu_custom_call.1} parent=5 // pred_region
        // Predicated region
        $region33: #{tpu_custom_call.1} parent=31 // pred_check
          %p178 = pneg %p31
        $region34: #{tpu_custom_call.1} parent=31 // pred_check_branch
          %180 = sbr.rel (%p178) target = $region36
        $region35: #{tpu_custom_call.1} parent=31 // pred_region
          %s181 = sand.u32 %s21, 1
          %s182 = sand.u32 %s21, 1
          %s183 = smul.addr %s182, 256
          %s184 = scalar_lea.vmem [#allocation2], %s183
          %s185 = smul.u32 8, %s11
          %s186 = smul.addr %s185, 8
          %s187 = scalar_lea.vmem %s0, %s186
          // Predicated region
          $region37: #{tpu_custom_call.1} parent=35 // pred_check
            _
          $region38: #{tpu_custom_call.1} parent=35 // pred_check_branch
            %189 = sbr.rel (0) target = $region40
          $region39: #{tpu_custom_call.1} parent=35 // pred_region
            // Predicated region
            $region41: #{tpu_custom_call.1} parent=39 // pred_check
              _
            $region42: #{tpu_custom_call.1} parent=39 // pred_check_branch
              %191 = sbr.rel (0) target = $region44
            $region43: #{tpu_custom_call.1} parent=39 // pred_region
              // Predicated region
              $region56: #{tpu_custom_call.1} parent=43 // pred_check
                _
              $region57: #{tpu_custom_call.1} parent=43 // pred_check_branch
                %268 = sbr.rel (0) target = $region59
              $region58: #{tpu_custom_call.1} parent=43 // pred_region
                loop: start=0, step=1, limit=1
                $region60: #{tpu_custom_call.1} parent=58 // loop_pre_header
                  _
                $region61: #{tpu_custom_call.1} parent=58 // loop_header
                  %s270 = sphi 0, %s274
                  %p271 = scmp.ge.s32.totalorder %s270, 1
                  %s275 = sphi %s187, %s187
                  %s276 = sphi %s184, %s184
                $region62: #{tpu_custom_call.1} parent=58 // loop_header_branch
                  %273 = sbr.rel (%p271) target = $region66
                $region63: #{tpu_custom_call.1} parent=58 // loop_body
                  %v277 = vld [vmem:[%s275] sm:$0xff]
                  %278 = vst [vmem:[%s276] sm:$0xff] %v277
                  %v279 = vld [vmem:[%s275 + $0x8] sm:$0xff]
                  %280 = vst [vmem:[%s276 + $0x8] sm:$0xff] %v279
                  %v281 = vld [vmem:[%s275 + $0x10] sm:$0xff]
                  %282 = vst [vmem:[%s276 + $0x10] sm:$0xff] %v281
                  %v283 = vld [vmem:[%s275 + $0x18] sm:$0xff]
                  %284 = vst [vmem:[%s276 + $0x18] sm:$0xff] %v283
                  %v285 = vld [vmem:[%s275 + $0x20] sm:$0xff]
                  %286 = vst [vmem:[%s276 + $0x20] sm:$0xff] %v285
                  %v287 = vld [vmem:[%s275 + $0x28] sm:$0xff]
                  %288 = vst [vmem:[%s276 + $0x28] sm:$0xff] %v287
                  %v289 = vld [vmem:[%s275 + $0x30] sm:$0xff]
                  %290 = vst [vmem:[%s276 + $0x30] sm:$0xff] %v289
                  %v291 = vld [vmem:[%s275 + $0x38] sm:$0xff]
                  %292 = vst [vmem:[%s276 + $0x38] sm:$0xff] %v291
                  %v293 = vld [vmem:[%s275 + $0x80] sm:$0xff]
                  %294 = vst [vmem:[%s276 + $0x40] sm:$0xff] %v293
                  %v295 = vld [vmem:[%s275 + $0x88] sm:$0xff]
                  %296 = vst [vmem:[%s276 + $0x48] sm:$0xff] %v295
                  %v297 = vld [vmem:[%s275 + $0x90] sm:$0xff]
                  %298 = vst [vmem:[%s276 + $0x50] sm:$0xff] %v297
                  %v299 = vld [vmem:[%s275 + $0x98] sm:$0xff]
                  %300 = vst [vmem:[%s276 + $0x58] sm:$0xff] %v299
                  %v301 = vld [vmem:[%s275 + $0xa0] sm:$0xff]
                  %302 = vst [vmem:[%s276 + $0x60] sm:$0xff] %v301
                  %v303 = vld [vmem:[%s275 + $0xa8] sm:$0xff]
                  %304 = vst [vmem:[%s276 + $0x68] sm:$0xff] %v303
                  %v305 = vld [vmem:[%s275 + $0xb0] sm:$0xff]
                  %306 = vst [vmem:[%s276 + $0x70] sm:$0xff] %v305
                  %v307 = vld [vmem:[%s275 + $0xb8] sm:$0xff]
                  %308 = vst [vmem:[%s276 + $0x78] sm:$0xff] %v307
                  %v309 = vld [vmem:[%s275 + $0x100] sm:$0xff]
                  %310 = vst [vmem:[%s276 + $0x80] sm:$0xff] %v309
                  %v311 = vld [vmem:[%s275 + $0x108] sm:$0xff]
                  %312 = vst [vmem:[%s276 + $0x88] sm:$0xff] %v311
                  %v313 = vld [vmem:[%s275 + $0x110] sm:$0xff]
                  %314 = vst [vmem:[%s276 + $0x90] sm:$0xff] %v313
                  %v315 = vld [vmem:[%s275 + $0x118] sm:$0xff]
                  %316 = vst [vmem:[%s276 + $0x98] sm:$0xff] %v315
                  %v317 = vld [vmem:[%s275 + $0x120] sm:$0xff]
                  %318 = vst [vmem:[%s276 + $0xa0] sm:$0xff] %v317
                  %v319 = vld [vmem:[%s275 + $0x128] sm:$0xff]
                  %320 = vst [vmem:[%s276 + $0xa8] sm:$0xff] %v319
                  %v321 = vld [vmem:[%s275 + $0x130] sm:$0xff]
                  %322 = vst [vmem:[%s276 + $0xb0] sm:$0xff] %v321
                  %v323 = vld [vmem:[%s275 + $0x138] sm:$0xff]
                  %324 = vst [vmem:[%s276 + $0xb8] sm:$0xff] %v323
                  %v325 = vld [vmem:[%s275 + $0x180] sm:$0xff]
                  %326 = vst [vmem:[%s276 + $0xc0] sm:$0xff] %v325
                  %v327 = vld [vmem:[%s275 + $0x188] sm:$0xff]
                  %328 = vst [vmem:[%s276 + $0xc8] sm:$0xff] %v327
                  %v329 = vld [vmem:[%s275 + $0x190] sm:$0xff]
                  %330 = vst [vmem:[%s276 + $0xd0] sm:$0xff] %v329
                  %v331 = vld [vmem:[%s275 + $0x198] sm:$0xff]
                  %332 = vst [vmem:[%s276 + $0xd8] sm:$0xff] %v331
                  %v333 = vld [vmem:[%s275 + $0x1a0] sm:$0xff]
                  %334 = vst [vmem:[%s276 + $0xe0] sm:$0xff] %v333
                  %v335 = vld [vmem:[%s275 + $0x1a8] sm:$0xff]
                  %336 = vst [vmem:[%s276 + $0xe8] sm:$0xff] %v335
                  %v337 = vld [vmem:[%s275 + $0x1b0] sm:$0xff]
                  %338 = vst [vmem:[%s276 + $0xf0] sm:$0xff] %v337
                  %v339 = vld [vmem:[%s275 + $0x1b8] sm:$0xff]
                  %340 = vst [vmem:[%s276 + $0xf8] sm:$0xff] %v339
                $region64: #{tpu_custom_call.1} parent=58 // loop_footer
                  %s274 = sadd.s32 1, %s270
                $region65: #{tpu_custom_call.1} parent=58 // loop_footer_branch
                  %269 = sbr.rel target = $region61
                $region66: #{tpu_custom_call.1} parent=58 // loop_exit
                  _
              $region59: #{tpu_custom_call.1} parent=43 // pred_fallthru
                _
              // Predicated region
              $region67: #{tpu_custom_call.1} parent=43 // pred_check
                _
              $region68: #{tpu_custom_call.1} parent=43 // pred_check_branch
                %342 = sbr.rel target = $region70
              $region69: #{tpu_custom_call.1} parent=43 // pred_region
                _
              $region70: #{tpu_custom_call.1} parent=43 // pred_fallthru
                _
            $region44: #{tpu_custom_call.1} parent=39 // pred_fallthru
              _
            // Predicated region
            $region45: #{tpu_custom_call.1} parent=39 // pred_check
              _
            $region46: #{tpu_custom_call.1} parent=39 // pred_check_branch
              %193 = sbr.rel target = $region48
            $region47: #{tpu_custom_call.1} parent=39 // pred_region
              loop: start=0, step=1, limit=1
              $region49: #{tpu_custom_call.1} parent=47 // loop_pre_header
                _
              $region50: #{tpu_custom_call.1} parent=47 // loop_header
                %s196 = sphi 0, %s200
                %p197 = scmp.ge.s32.totalorder %s196, 1
                %s201 = sphi %s187, %s187
                %s202 = sphi %s184, %s184
              $region51: #{tpu_custom_call.1} parent=47 // loop_header_branch
                %199 = sbr.rel (%p197) target = $region55
              $region52: #{tpu_custom_call.1} parent=47 // loop_body
                %v203 = vld [vmem:[%s201] sm:$0xff]
                %204 = vst [vmem:[%s202] sm:$0xff] %v203
                %v205 = vld [vmem:[%s201 + $0x8] sm:$0xff]
                %206 = vst [vmem:[%s202 + $0x8] sm:$0xff] %v205
                %v207 = vld [vmem:[%s201 + $0x10] sm:$0xff]
                %208 = vst [vmem:[%s202 + $0x10] sm:$0xff] %v207
                %v209 = vld [vmem:[%s201 + $0x18] sm:$0xff]
                %210 = vst [vmem:[%s202 + $0x18] sm:$0xff] %v209
                %v211 = vld [vmem:[%s201 + $0x20] sm:$0xff]
                %212 = vst [vmem:[%s202 + $0x20] sm:$0xff] %v211
                %v213 = vld [vmem:[%s201 + $0x28] sm:$0xff]
                %214 = vst [vmem:[%s202 + $0x28] sm:$0xff] %v213
                %v215 = vld [vmem:[%s201 + $0x30] sm:$0xff]
                %216 = vst [vmem:[%s202 + $0x30] sm:$0xff] %v215
                %v217 = vld [vmem:[%s201 + $0x38] sm:$0xff]
                %218 = vst [vmem:[%s202 + $0x38] sm:$0xff] %v217
                %v219 = vld [vmem:[%s201 + $0x80] sm:$0xff]
                %220 = vst [vmem:[%s202 + $0x40] sm:$0xff] %v219
                %v221 = vld [vmem:[%s201 + $0x88] sm:$0xff]
                %222 = vst [vmem:[%s202 + $0x48] sm:$0xff] %v221
                %v223 = vld [vmem:[%s201 + $0x90] sm:$0xff]
                %224 = vst [vmem:[%s202 + $0x50] sm:$0xff] %v223
                %v225 = vld [vmem:[%s201 + $0x98] sm:$0xff]
                %226 = vst [vmem:[%s202 + $0x58] sm:$0xff] %v225
                %v227 = vld [vmem:[%s201 + $0xa0] sm:$0xff]
                %228 = vst [vmem:[%s202 + $0x60] sm:$0xff] %v227
                %v229 = vld [vmem:[%s201 + $0xa8] sm:$0xff]
                %230 = vst [vmem:[%s202 + $0x68] sm:$0xff] %v229
                %v231 = vld [vmem:[%s201 + $0xb0] sm:$0xff]
                %232 = vst [vmem:[%s202 + $0x70] sm:$0xff] %v231
                %v233 = vld [vmem:[%s201 + $0xb8] sm:$0xff]
                %234 = vst [vmem:[%s202 + $0x78] sm:$0xff] %v233
                %v235 = vld [vmem:[%s201 + $0x100] sm:$0xff]
                %236 = vst [vmem:[%s202 + $0x80] sm:$0xff] %v235
                %v237 = vld [vmem:[%s201 + $0x108] sm:$0xff]
                %238 = vst [vmem:[%s202 + $0x88] sm:$0xff] %v237
                %v239 = vld [vmem:[%s201 + $0x110] sm:$0xff]
                %240 = vst [vmem:[%s202 + $0x90] sm:$0xff] %v239
                %v241 = vld [vmem:[%s201 + $0x118] sm:$0xff]
                %242 = vst [vmem:[%s202 + $0x98] sm:$0xff] %v241
                %v243 = vld [vmem:[%s201 + $0x120] sm:$0xff]
                %244 = vst [vmem:[%s202 + $0xa0] sm:$0xff] %v243
                %v245 = vld [vmem:[%s201 + $0x128] sm:$0xff]
                %246 = vst [vmem:[%s202 + $0xa8] sm:$0xff] %v245
                %v247 = vld [vmem:[%s201 + $0x130] sm:$0xff]
                %248 = vst [vmem:[%s202 + $0xb0] sm:$0xff] %v247
                %v249 = vld [vmem:[%s201 + $0x138] sm:$0xff]
                %250 = vst [vmem:[%s202 + $0xb8] sm:$0xff] %v249
                %v251 = vld [vmem:[%s201 + $0x180] sm:$0xff]
                %252 = vst [vmem:[%s202 + $0xc0] sm:$0xff] %v251
                %v253 = vld [vmem:[%s201 + $0x188] sm:$0xff]
                %254 = vst [vmem:[%s202 + $0xc8] sm:$0xff] %v253
                %v255 = vld [vmem:[%s201 + $0x190] sm:$0xff]
                %256 = vst [vmem:[%s202 + $0xd0] sm:$0xff] %v255
                %v257 = vld [vmem:[%s201 + $0x198] sm:$0xff]
                %258 = vst [vmem:[%s202 + $0xd8] sm:$0xff] %v257
                %v259 = vld [vmem:[%s201 + $0x1a0] sm:$0xff]
                %260 = vst [vmem:[%s202 + $0xe0] sm:$0xff] %v259
                %v261 = vld [vmem:[%s201 + $0x1a8] sm:$0xff]
                %262 = vst [vmem:[%s202 + $0xe8] sm:$0xff] %v261
                %v263 = vld [vmem:[%s201 + $0x1b0] sm:$0xff]
                %264 = vst [vmem:[%s202 + $0xf0] sm:$0xff] %v263
                %v265 = vld [vmem:[%s201 + $0x1b8] sm:$0xff]
                %266 = vst [vmem:[%s202 + $0xf8] sm:$0xff] %v265
              $region53: #{tpu_custom_call.1} parent=47 // loop_footer
                %s200 = sadd.s32 1, %s196
              $region54: #{tpu_custom_call.1} parent=47 // loop_footer_branch
                %195 = sbr.rel target = $region50
              $region55: #{tpu_custom_call.1} parent=47 // loop_exit
                _
            $region48: #{tpu_custom_call.1} parent=39 // pred_fallthru
              _
          $region40: #{tpu_custom_call.1} parent=35 // pred_fallthru
            _
          %343 = vnop
        $region36: #{tpu_custom_call.1} parent=31 // pred_fallthru
          _
      $region32: #{tpu_custom_call.1} parent=5 // pred_fallthru
        _
      %p344 = scmp.le.s32.totalorder 1, %s11
      %p345 = scmp.lt.s32.totalorder %s11, 3
      %p346 = pnand %p344, %p345
      %p347 = pneg %p346
      // Predicated region
      $region71: #{tpu_custom_call.1} parent=5 // pred_check
        _
      $region72: #{tpu_custom_call.1} parent=5 // pred_check_branch
        %349 = sbr.rel (%p346) target = $region74
      $region73: #{tpu_custom_call.1} parent=5 // pred_region
        %s350 = ssub.s32 %s11, 1
        %s351 = sand.u32 %s24, 1
        %s352 = sand.u32 %s24, 1
        %s353 = smul.addr %s352, 256
        %s354 = scalar_lea.vmem [#allocation2], %s353
        // Predicated region
        $region75: #{tpu_custom_call.1} parent=73 // pred_check
          %p355 = pneg %p37
        $region76: #{tpu_custom_call.1} parent=73 // pred_check_branch
          %357 = sbr.rel (%p355) target = $region78
        $region77: #{tpu_custom_call.1} parent=73 // pred_region
          _
        $region78: #{tpu_custom_call.1} parent=73 // pred_fallthru
          _
        %s358 = sand.u32 %s24, 1
        %s359 = sand.u32 %s24, 1
        %s360 = smul.addr %s359, 256
        %s361 = scalar_lea.vmem [#allocation2], %s360
        %p362 = pneg %p37
        %p363 = pneg %p34
        %p364 = pneg %p58
        %p365 = pneg %p55
        %p366 = pneg %p79
        %p367 = pneg %p76
        %p368 = pneg %p100
        %p369 = pneg %p97
        %p370 = pneg %p121
        %p371 = pneg %p118
        %p372 = pneg %p147
        %p373 = pneg %p144
        %s374 = smul.u32 8, %s16
        %p375 = scmp.lt.s32.totalorder %s374, 15
        %s376 = scalar_select %p375, %s374, 15
        %s377 = smul.addr %s376, 8
        %s378 = scalar_lea.vmem %s5, %s377
        %s379 = smul.u32 8, %s16
        %s380 = smul.u32 8, %s16
        %p381 = scmp.lt.s32.totalorder %s380, 15
        %s382 = scalar_select %p381, %s380, 15
        %s383 = smul.addr %s382, 8
        %s384 = scalar_lea.vmem %s5, %s383
        %s385 = smul.u32 8, %s16
        %v386 = vld [vmem:[%s354] sm:$0xff]
        %v387 = vld [vmem:[%s354 + $0x8] sm:$0xff]
        %v388 = vld [vmem:[%s354 + $0x10] sm:$0xff]
        %v389 = vld [vmem:[%s354 + $0x18] sm:$0xff]
        %v390 = vld [vmem:[%s354 + $0x20] sm:$0xff]
        %v391 = vld [vmem:[%s354 + $0x28] sm:$0xff]
        %v392 = vld [vmem:[%s354 + $0x30] sm:$0xff]
        %v393 = vld [vmem:[%s354 + $0x38] sm:$0xff]
        %s394 = scalar_lea.vmem %s354, 64 [#allocation2]
        %v395 = vld [vmem:[%s394] sm:$0xff]
        %v396 = vld [vmem:[%s394 + $0x8] sm:$0xff]
        %v397 = vld [vmem:[%s394 + $0x10] sm:$0xff]
        %v398 = vld [vmem:[%s394 + $0x18] sm:$0xff]
        %v399 = vld [vmem:[%s394 + $0x20] sm:$0xff]
        %v400 = vld [vmem:[%s394 + $0x28] sm:$0xff]
        %v401 = vld [vmem:[%s394 + $0x30] sm:$0xff]
        %v402 = vld [vmem:[%s394 + $0x38] sm:$0xff]
        %s403 = scalar_lea.vmem %s354, 128 [#allocation2]
        %v404 = vld [vmem:[%s403] sm:$0xff]
        %v405 = vld [vmem:[%s403 + $0x8] sm:$0xff]
        %v406 = vld [vmem:[%s403 + $0x10] sm:$0xff]
        %v407 = vld [vmem:[%s403 + $0x18] sm:$0xff]
        %v408 = vld [vmem:[%s403 + $0x20] sm:$0xff]
        %v409 = vld [vmem:[%s403 + $0x28] sm:$0xff]
        %v410 = vld [vmem:[%s403 + $0x30] sm:$0xff]
        %v411 = vld [vmem:[%s403 + $0x38] sm:$0xff]
        %s412 = scalar_lea.vmem %s354, 192 [#allocation2]
        %v413 = vld [vmem:[%s412] sm:$0xff]
        %v414 = vld [vmem:[%s412 + $0x8] sm:$0xff]
        %v415 = vld [vmem:[%s412 + $0x10] sm:$0xff]
        %v416 = vld [vmem:[%s412 + $0x18] sm:$0xff]
        %v417 = vld [vmem:[%s412 + $0x20] sm:$0xff]
        %v418 = vld [vmem:[%s412 + $0x28] sm:$0xff]
        %v419 = vld [vmem:[%s412 + $0x30] sm:$0xff]
        %v420 = vld [vmem:[%s412 + $0x38] sm:$0xff]
        %v421 = vadd.f32 %v386, %v395
        %v422 = vadd.f32 %v387, %v396
        %v423 = vadd.f32 %v388, %v397
        %v424 = vadd.f32 %v389, %v398
        %v425 = vadd.f32 %v390, %v399
        %v426 = vadd.f32 %v391, %v400
        %v427 = vadd.f32 %v392, %v401
        %v428 = vadd.f32 %v393, %v402
        %v429 = vadd.f32 %v421, %v404
        %v430 = vadd.f32 %v422, %v405
        %v431 = vadd.f32 %v423, %v406
        %v432 = vadd.f32 %v424, %v407
        %v433 = vadd.f32 %v425, %v408
        %v434 = vadd.f32 %v426, %v409
        %v435 = vadd.f32 %v427, %v410
        %v436 = vadd.f32 %v428, %v411
        %v437 = vadd.f32 %v429, %v413
        %v438 = vadd.f32 %v430, %v414
        %v439 = vadd.f32 %v431, %v415
        %v440 = vadd.f32 %v432, %v416
        %v441 = vadd.f32 %v433, %v417
        %v442 = vadd.f32 %v434, %v418
        %v443 = vadd.f32 %v435, %v419
        %v444 = vadd.f32 %v436, %v420
        %v445 = vmul.f32 %v437, 0.5
        %v446 = vmul.f32 %v438, 0.5
        %v447 = vmul.f32 %v439, 0.5
        %v448 = vmul.f32 %v440, 0.5
        %v449 = vmul.f32 %v441, 0.5
        %v450 = vmul.f32 %v442, 0.5
        %v451 = vmul.f32 %v443, 0.5
        %v452 = vmul.f32 %v444, 0.5
        %v453 = vsub.f32 %v421, %v404
        %v454 = vsub.f32 %v422, %v405
        %v455 = vsub.f32 %v423, %v406
        %v456 = vsub.f32 %v424, %v407
        %v457 = vsub.f32 %v425, %v408
        %v458 = vsub.f32 %v426, %v409
        %v459 = vsub.f32 %v427, %v410
        %v460 = vsub.f32 %v428, %v411
        %v461 = vsub.f32 %v453, %v413
        %v462 = vsub.f32 %v454, %v414
        %v463 = vsub.f32 %v455, %v415
        %v464 = vsub.f32 %v456, %v416
        %v465 = vsub.f32 %v457, %v417
        %v466 = vsub.f32 %v458, %v418
        %v467 = vsub.f32 %v459, %v419
        %v468 = vsub.f32 %v460, %v420
        %v469 = vmul.f32 %v461, 0.5
        %v470 = vmul.f32 %v462, 0.5
        %v471 = vmul.f32 %v463, 0.5
        %v472 = vmul.f32 %v464, 0.5
        %v473 = vmul.f32 %v465, 0.5
        %v474 = vmul.f32 %v466, 0.5
        %v475 = vmul.f32 %v467, 0.5
        %v476 = vmul.f32 %v468, 0.5
        %v477 = vsub.f32 %v386, %v395
        %v478 = vsub.f32 %v387, %v396
        %v479 = vsub.f32 %v388, %v397
        %v480 = vsub.f32 %v389, %v398
        %v481 = vsub.f32 %v390, %v399
        %v482 = vsub.f32 %v391, %v400
        %v483 = vsub.f32 %v392, %v401
        %v484 = vsub.f32 %v393, %v402
        %v485 = vadd.f32 %v477, %v404
        %v486 = vadd.f32 %v478, %v405
        %v487 = vadd.f32 %v479, %v406
        %v488 = vadd.f32 %v480, %v407
        %v489 = vadd.f32 %v481, %v408
        %v490 = vadd.f32 %v482, %v409
        %v491 = vadd.f32 %v483, %v410
        %v492 = vadd.f32 %v484, %v411
        %v493 = vsub.f32 %v485, %v413
        %v494 = vsub.f32 %v486, %v414
        %v495 = vsub.f32 %v487, %v415
        %v496 = vsub.f32 %v488, %v416
        %v497 = vsub.f32 %v489, %v417
        %v498 = vsub.f32 %v490, %v418
        %v499 = vsub.f32 %v491, %v419
        %v500 = vsub.f32 %v492, %v420
        %v501 = vmul.f32 %v493, 0.5
        %v502 = vmul.f32 %v494, 0.5
        %v503 = vmul.f32 %v495, 0.5
        %v504 = vmul.f32 %v496, 0.5
        %v505 = vmul.f32 %v497, 0.5
        %v506 = vmul.f32 %v498, 0.5
        %v507 = vmul.f32 %v499, 0.5
        %v508 = vmul.f32 %v500, 0.5
        %v509 = vsub.f32 %v477, %v404
        %v510 = vsub.f32 %v478, %v405
        %v511 = vsub.f32 %v479, %v406
        %v512 = vsub.f32 %v480, %v407
        %v513 = vsub.f32 %v481, %v408
        %v514 = vsub.f32 %v482, %v409
        %v515 = vsub.f32 %v483, %v410
        %v516 = vsub.f32 %v484, %v411
        %v517 = vadd.f32 %v509, %v413
        %v518 = vadd.f32 %v510, %v414
        %v519 = vadd.f32 %v511, %v415
        %v520 = vadd.f32 %v512, %v416
        %v521 = vadd.f32 %v513, %v417
        %v522 = vadd.f32 %v514, %v418
        %v523 = vadd.f32 %v515, %v419
        %v524 = vadd.f32 %v516, %v420
        %v525 = vmul.f32 %v517, 0.5
        %v526 = vmul.f32 %v518, 0.5
        %v527 = vmul.f32 %v519, 0.5
        %v528 = vmul.f32 %v520, 0.5
        %v529 = vmul.f32 %v521, 0.5
        %v530 = vmul.f32 %v522, 0.5
        %v531 = vmul.f32 %v523, 0.5
        %v532 = vmul.f32 %v524, 0.5
        %v533 = vld [vmem:[%s1] sm:$0x1]
        %v535 = vlaneseq
        %v536 = vshrl.u32 %v535, 7
        %v537 = vsub.s32 0, %v536
        %v538 = vrot.slane %v533, %v537
        %v540 = vmul.f32 %v445, %v538
        %v541 = vmul.f32 %v446, %v538
        %v542 = vmul.f32 %v447, %v538
        %v543 = vmul.f32 %v448, %v538
        %v544 = vmul.f32 %v449, %v538
        %v545 = vmul.f32 %v450, %v538
        %v546 = vmul.f32 %v451, %v538
        %v547 = vmul.f32 %v452, %v538
        %v548 = vld [vmem:[%s2] sm:$0x1]
        %v550 = vlaneseq
        %v551 = vshrl.u32 %v550, 7
        %v552 = vsub.s32 0, %v551
        %v553 = vrot.slane %v548, %v552
        %v555 = vadd.f32 %v540, %v553
        %v556 = vadd.f32 %v541, %v553
        %v557 = vadd.f32 %v542, %v553
        %v558 = vadd.f32 %v543, %v553
        %v559 = vadd.f32 %v544, %v553
        %v560 = vadd.f32 %v545, %v553
        %v561 = vadd.f32 %v546, %v553
        %v562 = vadd.f32 %v547, %v553
        %v563 = vmax.f32 %v555, 0.0
        %v564 = vmax.f32 %v556, 0.0
        %v565 = vmax.f32 %v557, 0.0
        %v566 = vmax.f32 %v558, 0.0
        %v567 = vmax.f32 %v559, 0.0
        %v568 = vmax.f32 %v560, 0.0
        %v569 = vmax.f32 %v561, 0.0
        %v570 = vmax.f32 %v562, 0.0
        %s571 = scalar_lea.vmem %s1, 1
        %v572 = vld [vmem:[%s571] sm:$0x1]
        %v574 = vlaneseq
        %v575 = vshrl.u32 %v574, 7
        %v576 = vsub.s32 0, %v575
        %v577 = vrot.slane %v572, %v576
        %v579 = vmul.f32 %v469, %v577
        %v580 = vmul.f32 %v470, %v577
        %v581 = vmul.f32 %v471, %v577
        %v582 = vmul.f32 %v472, %v577
        %v583 = vmul.f32 %v473, %v577
        %v584 = vmul.f32 %v474, %v577
        %v585 = vmul.f32 %v475, %v577
        %v586 = vmul.f32 %v476, %v577
        %s587 = scalar_lea.vmem %s2, 1
        %v588 = vld [vmem:[%s587] sm:$0x1]
        %v590 = vlaneseq
        %v591 = vshrl.u32 %v590, 7
        %v592 = vsub.s32 0, %v591
        %v593 = vrot.slane %v588, %v592
        %v595 = vadd.f32 %v579, %v593
        %v596 = vadd.f32 %v580, %v593
        %v597 = vadd.f32 %v581, %v593
        %v598 = vadd.f32 %v582, %v593
        %v599 = vadd.f32 %v583, %v593
        %v600 = vadd.f32 %v584, %v593
        %v601 = vadd.f32 %v585, %v593
        %v602 = vadd.f32 %v586, %v593
        %v603 = vmax.f32 %v595, 0.0
        %v604 = vmax.f32 %v596, 0.0
        %v605 = vmax.f32 %v597, 0.0
        %v606 = vmax.f32 %v598, 0.0
        %v607 = vmax.f32 %v599, 0.0
        %v608 = vmax.f32 %v600, 0.0
        %v609 = vmax.f32 %v601, 0.0
        %v610 = vmax.f32 %v602, 0.0
        %s611 = scalar_lea.vmem %s1, 2
        %v612 = vld [vmem:[%s611] sm:$0x1]
        %v614 = vlaneseq
        %v615 = vshrl.u32 %v614, 7
        %v616 = vsub.s32 0, %v615
        %v617 = vrot.slane %v612, %v616
        %v619 = vmul.f32 %v501, %v617
        %v620 = vmul.f32 %v502, %v617
        %v621 = vmul.f32 %v503, %v617
        %v622 = vmul.f32 %v504, %v617
        %v623 = vmul.f32 %v505, %v617
        %v624 = vmul.f32 %v506, %v617
        %v625 = vmul.f32 %v507, %v617
        %v626 = vmul.f32 %v508, %v617
        %s627 = scalar_lea.vmem %s2, 2
        %v628 = vld [vmem:[%s627] sm:$0x1]
        %v630 = vlaneseq
        %v631 = vshrl.u32 %v630, 7
        %v632 = vsub.s32 0, %v631
        %v633 = vrot.slane %v628, %v632
        %v635 = vadd.f32 %v619, %v633
        %v636 = vadd.f32 %v620, %v633
        %v637 = vadd.f32 %v621, %v633
        %v638 = vadd.f32 %v622, %v633
        %v639 = vadd.f32 %v623, %v633
        %v640 = vadd.f32 %v624, %v633
        %v641 = vadd.f32 %v625, %v633
        %v642 = vadd.f32 %v626, %v633
        %v643 = vmax.f32 %v635, 0.0
        %v644 = vmax.f32 %v636, 0.0
        %v645 = vmax.f32 %v637, 0.0
        %v646 = vmax.f32 %v638, 0.0
        %v647 = vmax.f32 %v639, 0.0
        %v648 = vmax.f32 %v640, 0.0
        %v649 = vmax.f32 %v641, 0.0
        %v650 = vmax.f32 %v642, 0.0
        %s651 = scalar_lea.vmem %s1, 3
        %v652 = vld [vmem:[%s651] sm:$0x1]
        %v654 = vlaneseq
        %v655 = vshrl.u32 %v654, 7
        %v656 = vsub.s32 0, %v655
        %v657 = vrot.slane %v652, %v656
        %v659 = vmul.f32 %v525, %v657
        %v660 = vmul.f32 %v526, %v657
        %v661 = vmul.f32 %v527, %v657
        %v662 = vmul.f32 %v528, %v657
        %v663 = vmul.f32 %v529, %v657
        %v664 = vmul.f32 %v530, %v657
        %v665 = vmul.f32 %v531, %v657
        %v666 = vmul.f32 %v532, %v657
        %s667 = scalar_lea.vmem %s2, 3
        %v668 = vld [vmem:[%s667] sm:$0x1]
        %v670 = vlaneseq
        %v671 = vshrl.u32 %v670, 7
        %v672 = vsub.s32 0, %v671
        %v673 = vrot.slane %v668, %v672
        %v675 = vadd.f32 %v659, %v673
        %v676 = vadd.f32 %v660, %v673
        %v677 = vadd.f32 %v661, %v673
        %v678 = vadd.f32 %v662, %v673
        %v679 = vadd.f32 %v663, %v673
        %v680 = vadd.f32 %v664, %v673
        %v681 = vadd.f32 %v665, %v673
        %v682 = vadd.f32 %v666, %v673
        %v683 = vmax.f32 %v675, 0.0
        %v684 = vmax.f32 %v676, 0.0
        %v685 = vmax.f32 %v677, 0.0
        %v686 = vmax.f32 %v678, 0.0
        %v687 = vmax.f32 %v679, 0.0
        %v688 = vmax.f32 %v680, 0.0
        %v689 = vmax.f32 %v681, 0.0
        %v690 = vmax.f32 %v682, 0.0
        %v691 = vld [vmem:[%s3] sm:$0xf]
        %s692 = scalar_lea.vmem %s3, 4
        %v693 = vld [vmem:[%s692] sm:$0xf]
        %vm694 = vcmask 31744
        %v696 = vsel %vm694, %v603, 0
        %v699 = vsel %vm694, %v604, 0
        %v702 = vsel %vm694, %v605, 0
        %v705 = vsel %vm694, %v606, 0
        %v708 = vsel %vm694, %v607, 0
        %v711 = vsel %vm694, %v608, 0
        %v714 = vsel %vm694, %v609, 0
        %v717 = vsel %vm694, %v610, 0
        %vm719 = vcmask 1043456
        %v721 = vsel %vm719, %v693, 0
        %723 = vmatprep.subr.mxu0 0.0
        %724 = vmatpush1.msra.mxu0 %v721
        %725 = vmatprep.subr.mxu0 0.0
        %726 = vmatpush1.msra.mxu0 0.0
        %727 = vmatprep.subr.mxu0 0.0
        %728 = vmatpush1.msra.mxu0 0.0
        %729 = vmatprep.subr.mxu0 0.0
        %730 = vmatpush1.msra.mxu0 0.0
        %731 = vmatprep.subr.mxu0 0.0
        %732 = vmatpush1.msra.mxu0 0.0
        %733 = vmatprep.subr.mxu0 0.0
        %734 = vmatpush1.msra.mxu0 0.0
        %735 = vmatprep.subr.mxu0 0.0
        %736 = vmatpush1.msra.mxu0 0.0
        %737 = vmatprep.subr.mxu0 0.0
        %738 = vmatpush1.msra.mxu0 0.0
        %739 = vmatprep.subr.mxu0 0.0
        %740 = vmatpush1.msra.mxu0 0.0
        %741 = vmatprep.subr.mxu0 0.0
        %742 = vmatpush1.msra.mxu0 0.0
        %743 = vmatprep.subr.mxu0 0.0
        %744 = vmatpush1.msra.mxu0 0.0
        %745 = vmatprep.subr.mxu0 0.0
        %746 = vmatpush1.msra.mxu0 0.0
        %747 = vmatprep.subr.mxu0 0.0
        %748 = vmatpush1.msra.mxu0 0.0
        %749 = vmatprep.subr.mxu0 0.0
        %750 = vmatpush1.msra.mxu0 0.0
        %751 = vmatprep.subr.mxu0 0.0
        %752 = vmatpush1.msra.mxu0 0.0
        %753 = vmatprep.subr.mxu0 0.0
        %754 = vmatpush1.msra.mxu0 0.0
        %755 = vmatprep.subr.mxu0 0.0
        %756 = vmatpush1.msra.mxu0 0.0
        %757 = vmatprep.subr.mxu0 0.0
        %758 = vmatpush1.msra.mxu0 0.0
        %759 = vmatprep.subr.mxu0 0.0
        %760 = vmatpush1.msra.mxu0 0.0
        %761 = vmatprep.subr.mxu0 0.0
        %762 = vmatpush1.msra.mxu0 0.0
        %763 = vmatprep.subr.mxu0 0.0
        %764 = vmatpush1.msra.mxu0 0.0
        %765 = vmatprep.subr.mxu0 0.0
        %766 = vmatpush1.msra.mxu0 0.0
        %767 = vmatprep.subr.mxu0 0.0
        %768 = vmatpush1.msra.mxu0 0.0
        %769 = vmatprep.subr.mxu0 0.0
        %770 = vmatpush1.msra.mxu0 0.0
        %771 = vmatprep.subr.mxu0 0.0
        %772 = vmatpush1.msra.mxu0 0.0
        %773 = vmatprep.subr.mxu0 0.0
        %774 = vmatpush1.msra.mxu0 0.0
        %775 = vmatprep.subr.mxu0 0.0
        %776 = vmatpush1.msra.mxu0 0.0
        %777 = vmatprep.subr.mxu0 0.0
        %778 = vmatpush1.msra.mxu0 0.0
        %779 = vmatprep.subr.mxu0 0.0
        %780 = vmatpush1.msra.mxu0 0.0
        %781 = vmatprep.subr.mxu0 0.0
        %782 = vmatpush1.msra.mxu0 0.0
        %783 = vmatprep.subr.mxu0 0.0
        %784 = vmatpush1.msra.mxu0 0.0
        %785 = vmatprep.subr.mxu0 0.0
        %786 = vmatpush1.msra.mxu0 0.0
        %787 = vmatprep.mubr.f32.mxu0 0.0
        %788 = vmatmul.mubr.f32.gmra.mrb[0].mxu0 %v696
        %v789 = vpop.f32.mrb[0].mxu0
        %v790 = vadd.f32 0.0, %v789
        %v791 = vpop.f32.mrb[0].mxu0
        %792 = vmatprep.mubr.f32.mxu0 0.0
        %793 = vmatmul.mubr.f32.gmra.mrb[0].mxu0 %v699
        %v794 = vpop.f32.mrb[0].mxu0
        %v795 = vadd.f32 0.0, %v794
        %v796 = vpop.f32.mrb[0].mxu0
        %797 = vmatprep.mubr.f32.mxu0 0.0
        %798 = vmatmul.mubr.f32.gmra.mrb[0].mxu0 %v702
        %v799 = vpop.f32.mrb[0].mxu0
        %v800 = vadd.f32 0.0, %v799
        %v801 = vpop.f32.mrb[0].mxu0
        %802 = vmatprep.mubr.f32.mxu0 0.0
        %803 = vmatmul.mubr.f32.gmra.mrb[0].mxu0 %v705
        %v804 = vpop.f32.mrb[0].mxu0
        %v805 = vadd.f32 0.0, %v804
        %v806 = vpop.f32.mrb[0].mxu0
        %807 = vmatprep.mubr.f32.mxu0 0.0
        %808 = vmatmul.mubr.f32.gmra.mrb[0].mxu0 %v708
        %v809 = vpop.f32.mrb[0].mxu0
        %v810 = vadd.f32 0.0, %v809
        %v811 = vpop.f32.mrb[0].mxu0
        %812 = vmatprep.mubr.f32.mxu0 0.0
        %813 = vmatmul.mubr.f32.gmra.mrb[0].mxu0 %v711
        %v814 = vpop.f32.mrb[0].mxu0
        %v815 = vadd.f32 0.0, %v814
        %v816 = vpop.f32.mrb[0].mxu0
        %817 = vmatprep.mubr.f32.mxu0 0.0
        %818 = vmatmul.mubr.f32.gmra.mrb[0].mxu0 %v714
        %v819 = vpop.f32.mrb[0].mxu0
        %v820 = vadd.f32 0.0, %v819
        %v821 = vpop.f32.mrb[0].mxu0
        %822 = vmatprep.mubr.f32.mxu0 0.0
        %823 = vmatmul.mubr.f32.gmra.mrb[0].mxu0 %v717
        %v824 = vpop.f32.mrb[0].mxu0
        %v825 = vadd.f32 0.0, %v824
        %v826 = vpop.f32.mrb[0].mxu0
        %827 = vdwg.mxu0
        %v829 = vsel %vm694, %v563, 0
        %v832 = vsel %vm694, %v564, 0
        %v835 = vsel %vm694, %v565, 0
        %v838 = vsel %vm694, %v566, 0
        %v841 = vsel %vm694, %v567, 0
        %v844 = vsel %vm694, %v568, 0
        %v847 = vsel %vm694, %v569, 0
        %v850 = vsel %vm694, %v570, 0
        %v853 = vsel %vm719, %v691, 0
        %855 = vmatprep.subr.mxu0 0.0
        %856 = vmatpush1.msra.mxu0 %v853
        %857 = vmatprep.subr.mxu0 0.0
        %858 = vmatpush1.msra.mxu0 0.0
        %859 = vmatprep.subr.mxu0 0.0
        %860 = vmatpush1.msra.mxu0 0.0
        %861 = vmatprep.subr.mxu0 0.0
        %862 = vmatpush1.msra.mxu0 0.0
        %863 = vmatprep.subr.mxu0 0.0
        %864 = vmatpush1.msra.mxu0 0.0
        %865 = vmatprep.subr.mxu0 0.0
        %866 = vmatpush1.msra.mxu0 0.0
        %867 = vmatprep.subr.mxu0 0.0
        %868 = vmatpush1.msra.mxu0 0.0
        %869 = vmatprep.subr.mxu0 0.0
        %870 = vmatpush1.msra.mxu0 0.0
        %871 = vmatprep.subr.mxu0 0.0
        %872 = vmatpush1.msra.mxu0 0.0
        %873 = vmatprep.subr.mxu0 0.0
        %874 = vmatpush1.msra.mxu0 0.0
        %875 = vmatprep.subr.mxu0 0.0
        %876 = vmatpush1.msra.mxu0 0.0
        %877 = vmatprep.subr.mxu0 0.0
        %878 = vmatpush1.msra.mxu0 0.0
        %879 = vmatprep.subr.mxu0 0.0
        %880 = vmatpush1.msra.mxu0 0.0
        %881 = vmatprep.subr.mxu0 0.0
        %882 = vmatpush1.msra.mxu0 0.0
        %883 = vmatprep.subr.mxu0 0.0
        %884 = vmatpush1.msra.mxu0 0.0
        %885 = vmatprep.subr.mxu0 0.0
        %886 = vmatpush1.msra.mxu0 0.0
        %887 = vmatprep.subr.mxu0 0.0
        %888 = vmatpush1.msra.mxu0 0.0
        %889 = vmatprep.subr.mxu0 0.0
        %890 = vmatpush1.msra.mxu0 0.0
        %891 = vmatprep.subr.mxu0 0.0
        %892 = vmatpush1.msra.mxu0 0.0
        %893 = vmatprep.subr.mxu0 0.0
        %894 = vmatpush1.msra.mxu0 0.0
        %895 = vmatprep.subr.mxu0 0.0
        %896 = vmatpush1.msra.mxu0 0.0
        %897 = vmatprep.subr.mxu0 0.0
        %898 = vmatpush1.msra.mxu0 0.0
        %899 = vmatprep.subr.mxu0 0.0
        %900 = vmatpush1.msra.mxu0 0.0
        %901 = vmatprep.subr.mxu0 0.0
        %902 = vmatpush1.msra.mxu0 0.0
        %903 = vmatprep.subr.mxu0 0.0
        %904 = vmatpush1.msra.mxu0 0.0
        %905 = vmatprep.subr.mxu0 0.0
        %906 = vmatpush1.msra.mxu0 0.0
        %907 = vmatprep.subr.mxu0 0.0
        %908 = vmatpush1.msra.mxu0 0.0
        %909 = vmatprep.subr.mxu0 0.0
        %910 = vmatpush1.msra.mxu0 0.0
        %911 = vmatprep.subr.mxu0 0.0
        %912 = vmatpush1.msra.mxu0 0.0
        %913 = vmatprep.subr.mxu0 0.0
        %914 = vmatpush1.msra.mxu0 0.0
        %915 = vmatprep.subr.mxu0 0.0
        %916 = vmatpush1.msra.mxu0 0.0
        %917 = vmatprep.subr.mxu0 0.0
        %918 = vmatpush1.msra.mxu0 0.0
        %919 = vmatprep.mubr.f32.mxu0 0.0
        %920 = vmatmul.mubr.f32.gmra.mrb[0].mxu0 %v829
        %v921 = vpop.f32.mrb[0].mxu0
        %v922 = vadd.f32 %v790, %v921
        %v923 = vpop.f32.mrb[0].mxu0
        %924 = vmatprep.mubr.f32.mxu0 0.0
        %925 = vmatmul.mubr.f32.gmra.mrb[0].mxu0 %v832
        %v926 = vpop.f32.mrb[0].mxu0
        %v927 = vadd.f32 %v795, %v926
        %v928 = vpop.f32.mrb[0].mxu0
        %929 = vmatprep.mubr.f32.mxu0 0.0
        %930 = vmatmul.mubr.f32.gmra.mrb[0].mxu0 %v835
        %v931 = vpop.f32.mrb[0].mxu0
        %v932 = vadd.f32 %v800, %v931
        %v933 = vpop.f32.mrb[0].mxu0
        %934 = vmatprep.mubr.f32.mxu0 0.0
        %935 = vmatmul.mubr.f32.gmra.mrb[0].mxu0 %v838
        %v936 = vpop.f32.mrb[0].mxu0
        %v937 = vadd.f32 %v805, %v936
        %v938 = vpop.f32.mrb[0].mxu0
        %939 = vmatprep.mubr.f32.mxu0 0.0
        %940 = vmatmul.mubr.f32.gmra.mrb[0].mxu0 %v841
        %v941 = vpop.f32.mrb[0].mxu0
        %v942 = vadd.f32 %v810, %v941
        %v943 = vpop.f32.mrb[0].mxu0
        %944 = vmatprep.mubr.f32.mxu0 0.0
        %945 = vmatmul.mubr.f32.gmra.mrb[0].mxu0 %v844
        %v946 = vpop.f32.mrb[0].mxu0
        %v947 = vadd.f32 %v815, %v946
        %v948 = vpop.f32.mrb[0].mxu0
        %949 = vmatprep.mubr.f32.mxu0 0.0
        %950 = vmatmul.mubr.f32.gmra.mrb[0].mxu0 %v847
        %v951 = vpop.f32.mrb[0].mxu0
        %v952 = vadd.f32 %v820, %v951
        %v953 = vpop.f32.mrb[0].mxu0
        %954 = vmatprep.mubr.f32.mxu0 0.0
        %955 = vmatmul.mubr.f32.gmra.mrb[0].mxu0 %v850
        %v956 = vpop.f32.mrb[0].mxu0
        %v957 = vadd.f32 %v825, %v956
        %v958 = vpop.f32.mrb[0].mxu0
        %959 = vdwg.mxu0
        %s960 = scalar_lea.vmem %s3, 8
        %v961 = vld [vmem:[%s960] sm:$0xf]
        %v963 = vsel %vm694, %v643, 0
        %v966 = vsel %vm694, %v644, 0
        %v969 = vsel %vm694, %v645, 0
        %v972 = vsel %vm694, %v646, 0
        %v975 = vsel %vm694, %v647, 0
        %v978 = vsel %vm694, %v648, 0
        %v981 = vsel %vm694, %v649, 0
        %v984 = vsel %vm694, %v650, 0
        %v987 = vsel %vm719, %v961, 0
        %989 = vmatprep.subr.mxu0 0.0
        %990 = vmatpush1.msra.mxu0 %v987
        %991 = vmatprep.subr.mxu0 0.0
        %992 = vmatpush1.msra.mxu0 0.0
        %993 = vmatprep.subr.mxu0 0.0
        %994 = vmatpush1.msra.mxu0 0.0
        %995 = vmatprep.subr.mxu0 0.0
        %996 = vmatpush1.msra.mxu0 0.0
        %997 = vmatprep.subr.mxu0 0.0
        %998 = vmatpush1.msra.mxu0 0.0
        %999 = vmatprep.subr.mxu0 0.0
        %1000 = vmatpush1.msra.mxu0 0.0
        %1001 = vmatprep.subr.mxu0 0.0
        %1002 = vmatpush1.msra.mxu0 0.0
        %1003 = vmatprep.subr.mxu0 0.0
        %1004 = vmatpush1.msra.mxu0 0.0
        %1005 = vmatprep.subr.mxu0 0.0
        %1006 = vmatpush1.msra.mxu0 0.0
        %1007 = vmatprep.subr.mxu0 0.0
        %1008 = vmatpush1.msra.mxu0 0.0
        %1009 = vmatprep.subr.mxu0 0.0
        %1010 = vmatpush1.msra.mxu0 0.0
        %1011 = vmatprep.subr.mxu0 0.0
        %1012 = vmatpush1.msra.mxu0 0.0
        %1013 = vmatprep.subr.mxu0 0.0
        %1014 = vmatpush1.msra.mxu0 0.0
        %1015 = vmatprep.subr.mxu0 0.0
        %1016 = vmatpush1.msra.mxu0 0.0
        %1017 = vmatprep.subr.mxu0 0.0
        %1018 = vmatpush1.msra.mxu0 0.0
        %1019 = vmatprep.subr.mxu0 0.0
        %1020 = vmatpush1.msra.mxu0 0.0
        %1021 = vmatprep.subr.mxu0 0.0
        %1022 = vmatpush1.msra.mxu0 0.0
        %1023 = vmatprep.subr.mxu0 0.0
        %1024 = vmatpush1.msra.mxu0 0.0
        %1025 = vmatprep.subr.mxu0 0.0
        %1026 = vmatpush1.msra.mxu0 0.0
        %1027 = vmatprep.subr.mxu0 0.0
        %1028 = vmatpush1.msra.mxu0 0.0
        %1029 = vmatprep.subr.mxu0 0.0
        %1030 = vmatpush1.msra.mxu0 0.0
        %1031 = vmatprep.subr.mxu0 0.0
        %1032 = vmatpush1.msra.mxu0 0.0
        %1033 = vmatprep.subr.mxu0 0.0
        %1034 = vmatpush1.msra.mxu0 0.0
        %1035 = vmatprep.subr.mxu0 0.0
        %1036 = vmatpush1.msra.mxu0 0.0
        %1037 = vmatprep.subr.mxu0 0.0
        %1038 = vmatpush1.msra.mxu0 0.0
        %1039 = vmatprep.subr.mxu0 0.0
        %1040 = vmatpush1.msra.mxu0 0.0
        %1041 = vmatprep.subr.mxu0 0.0
        %1042 = vmatpush1.msra.mxu0 0.0
        %1043 = vmatprep.subr.mxu0 0.0
        %1044 = vmatpush1.msra.mxu0 0.0
        %1045 = vmatprep.subr.mxu0 0.0
        %1046 = vmatpush1.msra.mxu0 0.0
        %1047 = vmatprep.subr.mxu0 0.0
        %1048 = vmatpush1.msra.mxu0 0.0
        %1049 = vmatprep.subr.mxu0 0.0
        %1050 = vmatpush1.msra.mxu0 0.0
        %1051 = vmatprep.subr.mxu0 0.0
        %1052 = vmatpush1.msra.mxu0 0.0
        %1053 = vmatprep.mubr.f32.mxu0 0.0
        %1054 = vmatmul.mubr.f32.gmra.mrb[0].mxu0 %v963
        %v1055 = vpop.f32.mrb[0].mxu0
        %v1056 = vadd.f32 0.0, %v1055
        %v1057 = vpop.f32.mrb[0].mxu0
        %1058 = vmatprep.mubr.f32.mxu0 0.0
        %1059 = vmatmul.mubr.f32.gmra.mrb[0].mxu0 %v966
        %v1060 = vpop.f32.mrb[0].mxu0
        %v1061 = vadd.f32 0.0, %v1060
        %v1062 = vpop.f32.mrb[0].mxu0
        %1063 = vmatprep.mubr.f32.mxu0 0.0
        %1064 = vmatmul.mubr.f32.gmra.mrb[0].mxu0 %v969
        %v1065 = vpop.f32.mrb[0].mxu0
        %v1066 = vadd.f32 0.0, %v1065
        %v1067 = vpop.f32.mrb[0].mxu0
        %1068 = vmatprep.mubr.f32.mxu0 0.0
        %1069 = vmatmul.mubr.f32.gmra.mrb[0].mxu0 %v972
        %v1070 = vpop.f32.mrb[0].mxu0
        %v1071 = vadd.f32 0.0, %v1070
        %v1072 = vpop.f32.mrb[0].mxu0
        %1073 = vmatprep.mubr.f32.mxu0 0.0
        %1074 = vmatmul.mubr.f32.gmra.mrb[0].mxu0 %v975
        %v1075 = vpop.f32.mrb[0].mxu0
        %v1076 = vadd.f32 0.0, %v1075
        %v1077 = vpop.f32.mrb[0].mxu0
        %1078 = vmatprep.mubr.f32.mxu0 0.0
        %1079 = vmatmul.mubr.f32.gmra.mrb[0].mxu0 %v978
        %v1080 = vpop.f32.mrb[0].mxu0
        %v1081 = vadd.f32 0.0, %v1080
        %v1082 = vpop.f32.mrb[0].mxu0
        %1083 = vmatprep.mubr.f32.mxu0 0.0
        %1084 = vmatmul.mubr.f32.gmra.mrb[0].mxu0 %v981
        %v1085 = vpop.f32.mrb[0].mxu0
        %v1086 = vadd.f32 0.0, %v1085
        %v1087 = vpop.f32.mrb[0].mxu0
        %1088 = vmatprep.mubr.f32.mxu0 0.0
        %1089 = vmatmul.mubr.f32.gmra.mrb[0].mxu0 %v984
        %v1090 = vpop.f32.mrb[0].mxu0
        %v1091 = vadd.f32 0.0, %v1090
        %v1092 = vpop.f32.mrb[0].mxu0
        %1093 = vdwg.mxu0
        %v1094 = vadd.f32 %v922, %v1056
        %v1095 = vadd.f32 %v927, %v1061
        %v1096 = vadd.f32 %v932, %v1066
        %v1097 = vadd.f32 %v937, %v1071
        %v1098 = vadd.f32 %v942, %v1076
        %v1099 = vadd.f32 %v947, %v1081
        %v1100 = vadd.f32 %v952, %v1086
        %v1101 = vadd.f32 %v957, %v1091
        %s1102 = scalar_lea.vmem %s3, 12
        %v1103 = vld [vmem:[%s1102] sm:$0xf]
        %v1105 = vsel %vm694, %v683, 0
        %v1108 = vsel %vm694, %v684, 0
        %v1111 = vsel %vm694, %v685, 0
        %v1114 = vsel %vm694, %v686, 0
        %v1117 = vsel %vm694, %v687, 0
        %v1120 = vsel %vm694, %v688, 0
        %v1123 = vsel %vm694, %v689, 0
        %v1126 = vsel %vm694, %v690, 0
        %v1129 = vsel %vm719, %v1103, 0
        %1131 = vmatprep.subr.mxu0 0.0
        %1132 = vmatpush1.msra.mxu0 %v1129
        %1133 = vmatprep.subr.mxu0 0.0
        %1134 = vmatpush1.msra.mxu0 0.0
        %1135 = vmatprep.subr.mxu0 0.0
        %1136 = vmatpush1.msra.mxu0 0.0
        %1137 = vmatprep.subr.mxu0 0.0
        %1138 = vmatpush1.msra.mxu0 0.0
        %1139 = vmatprep.subr.mxu0 0.0
        %1140 = vmatpush1.msra.mxu0 0.0
        %1141 = vmatprep.subr.mxu0 0.0
        %1142 = vmatpush1.msra.mxu0 0.0
        %1143 = vmatprep.subr.mxu0 0.0
        %1144 = vmatpush1.msra.mxu0 0.0
        %1145 = vmatprep.subr.mxu0 0.0
        %1146 = vmatpush1.msra.mxu0 0.0
        %1147 = vmatprep.subr.mxu0 0.0
        %1148 = vmatpush1.msra.mxu0 0.0
        %1149 = vmatprep.subr.mxu0 0.0
        %1150 = vmatpush1.msra.mxu0 0.0
        %1151 = vmatprep.subr.mxu0 0.0
        %1152 = vmatpush1.msra.mxu0 0.0
        %1153 = vmatprep.subr.mxu0 0.0
        %1154 = vmatpush1.msra.mxu0 0.0
        %1155 = vmatprep.subr.mxu0 0.0
        %1156 = vmatpush1.msra.mxu0 0.0
        %1157 = vmatprep.subr.mxu0 0.0
        %1158 = vmatpush1.msra.mxu0 0.0
        %1159 = vmatprep.subr.mxu0 0.0
        %1160 = vmatpush1.msra.mxu0 0.0
        %1161 = vmatprep.subr.mxu0 0.0
        %1162 = vmatpush1.msra.mxu0 0.0
        %1163 = vmatprep.subr.mxu0 0.0
        %1164 = vmatpush1.msra.mxu0 0.0
        %1165 = vmatprep.subr.mxu0 0.0
        %1166 = vmatpush1.msra.mxu0 0.0
        %1167 = vmatprep.subr.mxu0 0.0
        %1168 = vmatpush1.msra.mxu0 0.0
        %1169 = vmatprep.subr.mxu0 0.0
        %1170 = vmatpush1.msra.mxu0 0.0
        %1171 = vmatprep.subr.mxu0 0.0
        %1172 = vmatpush1.msra.mxu0 0.0
        %1173 = vmatprep.subr.mxu0 0.0
        %1174 = vmatpush1.msra.mxu0 0.0
        %1175 = vmatprep.subr.mxu0 0.0
        %1176 = vmatpush1.msra.mxu0 0.0
        %1177 = vmatprep.subr.mxu0 0.0
        %1178 = vmatpush1.msra.mxu0 0.0
        %1179 = vmatprep.subr.mxu0 0.0
        %1180 = vmatpush1.msra.mxu0 0.0
        %1181 = vmatprep.subr.mxu0 0.0
        %1182 = vmatpush1.msra.mxu0 0.0
        %1183 = vmatprep.subr.mxu0 0.0
        %1184 = vmatpush1.msra.mxu0 0.0
        %1185 = vmatprep.subr.mxu0 0.0
        %1186 = vmatpush1.msra.mxu0 0.0
        %1187 = vmatprep.subr.mxu0 0.0
        %1188 = vmatpush1.msra.mxu0 0.0
        %1189 = vmatprep.subr.mxu0 0.0
        %1190 = vmatpush1.msra.mxu0 0.0
        %1191 = vmatprep.subr.mxu0 0.0
        %1192 = vmatpush1.msra.mxu0 0.0
        %1193 = vmatprep.subr.mxu0 0.0
        %1194 = vmatpush1.msra.mxu0 0.0
        %1195 = vmatprep.mubr.f32.mxu0 0.0
        %1196 = vmatmul.mubr.f32.gmra.mrb[0].mxu0 %v1105
        %v1197 = vpop.f32.mrb[0].mxu0
        %v1198 = vadd.f32 0.0, %v1197
        %v1199 = vpop.f32.mrb[0].mxu0
        %1200 = vmatprep.mubr.f32.mxu0 0.0
        %1201 = vmatmul.mubr.f32.gmra.mrb[0].mxu0 %v1108
        %v1202 = vpop.f32.mrb[0].mxu0
        %v1203 = vadd.f32 0.0, %v1202
        %v1204 = vpop.f32.mrb[0].mxu0
        %1205 = vmatprep.mubr.f32.mxu0 0.0
        %1206 = vmatmul.mubr.f32.gmra.mrb[0].mxu0 %v1111
        %v1207 = vpop.f32.mrb[0].mxu0
        %v1208 = vadd.f32 0.0, %v1207
        %v1209 = vpop.f32.mrb[0].mxu0
        %1210 = vmatprep.mubr.f32.mxu0 0.0
        %1211 = vmatmul.mubr.f32.gmra.mrb[0].mxu0 %v1114
        %v1212 = vpop.f32.mrb[0].mxu0
        %v1213 = vadd.f32 0.0, %v1212
        %v1214 = vpop.f32.mrb[0].mxu0
        %1215 = vmatprep.mubr.f32.mxu0 0.0
        %1216 = vmatmul.mubr.f32.gmra.mrb[0].mxu0 %v1117
        %v1217 = vpop.f32.mrb[0].mxu0
        %v1218 = vadd.f32 0.0, %v1217
        %v1219 = vpop.f32.mrb[0].mxu0
        %1220 = vmatprep.mubr.f32.mxu0 0.0
        %1221 = vmatmul.mubr.f32.gmra.mrb[0].mxu0 %v1120
        %v1222 = vpop.f32.mrb[0].mxu0
        %v1223 = vadd.f32 0.0, %v1222
        %v1224 = vpop.f32.mrb[0].mxu0
        %1225 = vmatprep.mubr.f32.mxu0 0.0
        %1226 = vmatmul.mubr.f32.gmra.mrb[0].mxu0 %v1123
        %v1227 = vpop.f32.mrb[0].mxu0
        %v1228 = vadd.f32 0.0, %v1227
        %v1229 = vpop.f32.mrb[0].mxu0
        %1230 = vmatprep.mubr.f32.mxu0 0.0
        %1231 = vmatmul.mubr.f32.gmra.mrb[0].mxu0 %v1126
        %v1232 = vpop.f32.mrb[0].mxu0
        %v1233 = vadd.f32 0.0, %v1232
        %v1234 = vpop.f32.mrb[0].mxu0
        %1235 = vdwg.mxu0
        %v1236 = vadd.f32 %v1094, %v1198
        %v1237 = vadd.f32 %v1095, %v1203
        %v1238 = vadd.f32 %v1096, %v1208
        %v1239 = vadd.f32 %v1097, %v1213
        %v1240 = vadd.f32 %v1098, %v1218
        %v1241 = vadd.f32 %v1099, %v1223
        %v1242 = vadd.f32 %v1100, %v1228
        %v1243 = vadd.f32 %v1101, %v1233
        %v1244 = vld [vmem:[%s4] sm:$0x1]
        %v1246 = vlaneseq
        %v1247 = vshrl.u32 %v1246, 7
        %v1248 = vsub.s32 0, %v1247
        %v1249 = vrot.slane %v1244, %v1248
        %v1251 = vadd.f32 %v1236, %v1249
        %v1252 = vadd.f32 %v1237, %v1249
        %v1253 = vadd.f32 %v1238, %v1249
        %v1254 = vadd.f32 %v1239, %v1249
        %v1255 = vadd.f32 %v1240, %v1249
        %v1256 = vadd.f32 %v1241, %v1249
        %v1257 = vadd.f32 %v1242, %v1249
        %v1258 = vadd.f32 %v1243, %v1249
        %vm1259 = vcmask 64512
        %1260 = vst.msk [vmem:[%s384] sm:$0xff] %vm1259, %v1251
        %1261 = vst.msk [vmem:[%s384 + $0x8] sm:$0xff] %vm1259, %v1252
        %1262 = vst.msk [vmem:[%s384 + $0x10] sm:$0xff] %vm1259, %v1253
        %1263 = vst.msk [vmem:[%s384 + $0x18] sm:$0xff] %vm1259, %v1254
        %1264 = vst.msk [vmem:[%s384 + $0x20] sm:$0xff] %vm1259, %v1255
        %1265 = vst.msk [vmem:[%s384 + $0x28] sm:$0xff] %vm1259, %v1256
        %1266 = vst.msk [vmem:[%s384 + $0x30] sm:$0xff] %vm1259, %v1257
        %1267 = vst.msk [vmem:[%s384 + $0x38] sm:$0xff] %vm1259, %v1258
        %s1268 = smul.u32 8, %s16
        %p1269 = scmp.lt.s32.totalorder %s1268, 15
        %s1270 = scalar_select %p1269, %s1268, 15
        %s1271 = smul.addr %s1270, 8
        %s1272 = scalar_lea.vmem %s5, %s1271
        // Predicated region
        $region79: #{tpu_custom_call.1} parent=73 // pred_check
          %p1273 = pneg %p144
        $region80: #{tpu_custom_call.1} parent=73 // pred_check_branch
          %1275 = sbr.rel (%p1273) target = $region82
        $region81: #{tpu_custom_call.1} parent=73 // pred_region
          %s1276 = smul.u32 8, %s16
        $region82: #{tpu_custom_call.1} parent=73 // pred_fallthru
          _
      $region74: #{tpu_custom_call.1} parent=5 // pred_fallthru
        _
      %p1277 = scmp.le.s32.totalorder 2, %s11
      // Predicated region
      $region83: #{tpu_custom_call.1} parent=5 // pred_check
        %p1278 = pneg %p1277
      $region84: #{tpu_custom_call.1} parent=5 // pred_check_branch
        %1280 = sbr.rel (%p1278) target = $region86
      $region85: #{tpu_custom_call.1} parent=5 // pred_region
        %s1281 = ssub.s32 %s11, 2
        // Predicated region
        $region87: #{tpu_custom_call.1} parent=85 // pred_check
          %p1282 = pneg %p150
        $region88: #{tpu_custom_call.1} parent=85 // pred_check_branch
          %1284 = sbr.rel (%p1282) target = $region90
        $region89: #{tpu_custom_call.1} parent=85 // pred_region
          %s1285 = smul.u32 8, %s17
          %p1286 = scmp.lt.s32.totalorder %s1285, 15
          %s1287 = scalar_select %p1286, %s1285, 15
          %s1288 = smul.addr %s1287, 8
          %s1289 = scalar_lea.vmem %s5, %s1288
        $region90: #{tpu_custom_call.1} parent=85 // pred_fallthru
          _
      $region86: #{tpu_custom_call.1} parent=5 // pred_fallthru
        _
    $region6: #{tpu_custom_call.1} parent=1 // loop_footer
      %s15 = sadd.s32 1, %s11
    $region7: #{tpu_custom_call.1} parent=1 // loop_footer_branch
      %10 = sbr.rel target = $region3
    $region8: #{tpu_custom_call.1} parent=1 // loop_exit
      _

</llo_original>
